<compile_context>
chip_gen: v5e
topology: v5e:2x2
jax: 0.10.0
libtpu: 0.0.40
codegen_flags: <defaults>
</compile_context>

<pallas_src>
import jax
import jax.numpy as jnp
from jax.experimental import pallas as pl
from jax.experimental.pallas import tpu as pltpu


def _up_kernel(w_ref, s_ref, x_ref, o_ref):
    """Fused ConvTranspose2d(k=2, s=2, bias=False) + BatchNorm2d(eval) + ReLU.

    w_ref : SMEM (C_in*C_out*4,) f32  BN-scale-folded deconv weights, flattened
            with index (((ci*C_out + co)*2 + kh)*2 + kw).
    s_ref : SMEM (C_out,) f32         BN shift = beta - running_mean*scale.
    x_ref : VMEM (1, C_in, TH, W)     input band, NCHW layout.
    o_ref : VMEM (1, C_out, 2*TH, 2*W) output band, NCHW layout (dense store).
    """
    _, c_in, th, w = x_ref.shape
    c_out = o_ref.shape[1]
    f32 = jnp.float32

    # Column-spread matrices E0/E1 (W, 2W): E0[w, 2w] = 1, E1[w, 2w+1] = 1.
    er = jax.lax.broadcasted_iota(jnp.int32, (w, 2 * w), 0)
    ec = jax.lax.broadcasted_iota(jnp.int32, (w, 2 * w), 1)
    e0 = (ec == 2 * er).astype(f32)
    e1 = (ec == 2 * er + 1).astype(f32)

    # Row-spread matrices R0/R1 (2TH, TH): R0[2t, t] = 1, R1[2t+1, t] = 1.
    rr = jax.lax.broadcasted_iota(jnp.int32, (2 * th, th), 0)
    rc = jax.lax.broadcasted_iota(jnp.int32, (2 * th, th), 1)
    r0 = (rr == 2 * rc).astype(f32)
    r1 = (rr == 2 * rc + 1).astype(f32)

    # Hoist the input channel planes (loaded once, reused for every co).
    xs = [x_ref[0, ci].astype(f32) for ci in range(c_in)]

    def widx(ci, co, kh, kw):
        return ((ci * c_out + co) * 2 + kh) * 2 + kw

    for co in range(c_out):
        rows = []
        for kh in range(2):
            # Exact f32 channel mixing on the VPU (scalar broadcast FMAs).
            za = xs[0] * w_ref[widx(0, co, kh, 0)]
            zb = xs[0] * w_ref[widx(0, co, kh, 1)]
            for ci in range(1, c_in):
                za = za + xs[ci] * w_ref[widx(ci, co, kh, 0)]
                zb = zb + xs[ci] * w_ref[widx(ci, co, kh, 1)]
            # Interleave the kw=0 / kw=1 taps into a lane-dense (TH, 2W) band
            # (MXU used purely as a data mover; it is idle otherwise).
            rows.append(
                jnp.dot(za, e0, preferred_element_type=f32)
                + jnp.dot(zb, e1, preferred_element_type=f32)
            )
        # Interleave the kh=0 / kh=1 bands into the dense (2TH, 2W) block.
        full = (jnp.dot(r0, rows[0], preferred_element_type=f32)
                + jnp.dot(r1, rows[1], preferred_element_type=f32))
        # BN shift + ReLU epilogue.
        full = jnp.maximum(full + s_ref[co], 0.0)
        o_ref[0, co] = full.astype(o_ref.dtype)


def _pick_tile_h(h):
    # Largest H tile (capped) that divides H: no padding, no boundary masking,
    # few grid steps (per-step overhead ~0.35us), tiny VMEM at these channels.
    for th in (64, 32, 16, 8):
        if th <= h and h % th == 0:
            return th
    return h


@jax.jit
def up_forward(x, weight, gamma, beta, running_mean, running_var, eps=1e-5):
    """Forward of Up (bilinear=False): ConvTranspose2d(k=2,s=2,bias=False) -> BN(eval) -> ReLU.

    x      : (N, C_in, H, W) f32
    weight : (C_in, C_out, 2, 2) f32   (PyTorch ConvTranspose2d weight layout)
    gamma, beta, running_mean, running_var : (C_out,) f32
    returns (N, C_out, 2H, 2W) f32
    """
    n, c_in, h, w = x.shape
    c_out = weight.shape[1]
    assert weight.shape == (c_in, c_out, 2, 2), "kernel targets module defaults k=2, s=2"

    # Fold inference BatchNorm into the deconv weights (per output channel).
    scale = gamma / jnp.sqrt(running_var + eps)                      # (C_out,)
    shift = (beta - running_mean * scale).astype(jnp.float32)        # (C_out,)
    w_eff = (weight * scale[None, :, None, None]).astype(jnp.float32)
    w_flat = w_eff.reshape(-1)                                       # (C_in*C_out*4,)

    tile_h = _pick_tile_h(h)
    grid = (n, h // tile_h)

    return pl.pallas_call(
        _up_kernel,
        out_shape=jax.ShapeDtypeStruct((n, c_out, 2 * h, 2 * w), x.dtype),
        grid=grid,
        in_specs=[
            pl.BlockSpec(memory_space=pltpu.MemorySpace.SMEM),       # w_flat (resident)
            pl.BlockSpec(memory_space=pltpu.MemorySpace.SMEM),       # shift  (resident)
            pl.BlockSpec((1, c_in, tile_h, w), lambda i, t: (i, 0, t, 0)),
        ],
        out_specs=pl.BlockSpec((1, c_out, 2 * tile_h, 2 * w), lambda i, t: (i, 0, t, 0)),
        compiler_params=pltpu.CompilerParams(
            dimension_semantics=("parallel", "parallel")),
    )(w_flat, shift, x)


if __name__ == "__main__":
    # Small shapes consistent with Up(in_channels=4, out_channels=4, k=2, s=2).
    N, C_IN, C_OUT, H, W = 2, 4, 4, 16, 16
    EPS = 1e-5

    key = jax.random.PRNGKey(0)
    kx, kw_, kg, kb, km, kv = jax.random.split(key, 6)

    x = jax.random.normal(kx, (N, C_IN, H, W), dtype=jnp.float32)
    bound = (C_IN * 2 * 2) ** -0.5
    weight = jax.random.uniform(kw_, (C_IN, C_OUT, 2, 2),
                                minval=-bound, maxval=bound, dtype=jnp.float32)
    # Non-trivial (inference) BatchNorm parameters so the BN fusion is exercised.
    gamma = 1.0 + 0.1 * jax.random.normal(kg, (C_OUT,), dtype=jnp.float32)
    beta = 0.1 * jax.random.normal(kb, (C_OUT,), dtype=jnp.float32)
    running_mean = 0.1 * jax.random.normal(km, (C_OUT,), dtype=jnp.float32)
    running_var = jax.random.uniform(kv, (C_OUT,), minval=0.5, maxval=1.5,
                                     dtype=jnp.float32)

    out = up_forward(x, weight, gamma, beta, running_mean, running_var, EPS)
    out = jax.block_until_ready(out)

    # Reference: plain JAX, elementwise only (exact f32, no MXU passes).
    # ConvTranspose2d(k=2,s=2): out[n,co,2h+kh,2w+kw] = sum_ci x[n,ci,h,w]*W[ci,co,kh,kw]
    ref6 = jnp.sum(
        x[:, :, None, :, None, :, None]            # (N, C_in, 1,     H, 1, W, 1)
        * weight[None, :, :, None, :, None, :],    # (1, C_in, C_out, 1, 2, 1, 2)
        axis=1,
    )                                              # (N, C_out, H, 2, W, 2)
    ref = ref6.reshape(N, C_OUT, 2 * H, 2 * W)
    scale_ref = gamma / jnp.sqrt(running_var + EPS)
    shift_ref = beta - running_mean * scale_ref
    ref = jnp.maximum(ref * scale_ref[None, :, None, None]
                      + shift_ref[None, :, None, None], 0.0)

    max_err = float(jnp.max(jnp.abs(out - ref)))
    assert out.shape == (N, C_OUT, 2 * H, 2 * W)
    # Tolerance is set to also cover the case where the MXU runs f32 matmuls in
    # bf16 passes (worst-case ~0.4% rel on the spread matmuls); typically the
    # observed error is ~1e-6.
    assert jnp.allclose(out, ref, atol=2e-2, rtol=2e-2), f"max abs err {max_err}"

    print("KERNEL_OK")
</pallas_src>

<mosaic_0001>
module attributes {stable_mosaic.version = 11 : i64} {
  func.func @_up_kernel(%arg0: i32, %arg1: i32, %arg2: memref<64xf32, #tpu.memory_space<smem>>, %arg3: memref<4xf32, #tpu.memory_space<smem>>, %arg4: memref<1x4x16x16xf32, #tpu.memory_space<vmem>>, %arg5: memref<1x4x32x32xf32, #tpu.memory_space<vmem>>) attributes {dimension_semantics = [#tpu.dimension_semantics<parallel>, #tpu.dimension_semantics<parallel>], iteration_bounds = array<i64: 2, 1>, scalar_prefetch = 0 : i64, scratch_operands = 0 : i64, tpu.core_type = #tpu.core_type<tc>, window_params = [{transform_indices = @transform_0, window_bounds = array<i64: 64>}, {transform_indices = @transform_1, window_bounds = array<i64: 4>}, {transform_indices = @transform_2, window_bounds = array<i64: 1, 4, 16, 16>}, {transform_indices = @transform_3, window_bounds = array<i64: 1, 4, 32, 32>}]} {
    %0 = tpu.iota {dimensions = array<i32: 0>} : vector<16x32xi32>
    %1 = tpu.iota {dimensions = array<i32: 1>} : vector<16x32xi32>
    %c2_i32 = arith.constant 2 : i32
    %2 = vector.broadcast %c2_i32 : i32 to vector<16x32xi32>
    %3 = arith.muli %2, %0 : vector<16x32xi32>
    %4 = arith.cmpi eq, %1, %3 : vector<16x32xi32>
    %5 = arith.extui %4 : vector<16x32xi1> to vector<16x32xi32>
    %6 = arith.sitofp %5 : vector<16x32xi32> to vector<16x32xf32>
    %c2_i32_0 = arith.constant 2 : i32
    %7 = vector.broadcast %c2_i32_0 : i32 to vector<16x32xi32>
    %8 = arith.muli %7, %0 : vector<16x32xi32>
    %c1_i32 = arith.constant 1 : i32
    %9 = vector.broadcast %c1_i32 : i32 to vector<16x32xi32>
    %10 = arith.addi %8, %9 : vector<16x32xi32>
    %11 = arith.cmpi eq, %1, %10 : vector<16x32xi32>
    %12 = arith.extui %11 : vector<16x32xi1> to vector<16x32xi32>
    %13 = arith.sitofp %12 : vector<16x32xi32> to vector<16x32xf32>
    %14 = tpu.iota {dimensions = array<i32: 0>} : vector<32x16xi32>
    %15 = tpu.iota {dimensions = array<i32: 1>} : vector<32x16xi32>
    %c2_i32_1 = arith.constant 2 : i32
    %16 = vector.broadcast %c2_i32_1 : i32 to vector<32x16xi32>
    %17 = arith.muli %16, %15 : vector<32x16xi32>
    %18 = arith.cmpi eq, %14, %17 : vector<32x16xi32>
    %19 = arith.extui %18 : vector<32x16xi1> to vector<32x16xi32>
    %20 = arith.sitofp %19 : vector<32x16xi32> to vector<32x16xf32>
    %c2_i32_2 = arith.constant 2 : i32
    %21 = vector.broadcast %c2_i32_2 : i32 to vector<32x16xi32>
    %22 = arith.muli %21, %15 : vector<32x16xi32>
    %c1_i32_3 = arith.constant 1 : i32
    %23 = vector.broadcast %c1_i32_3 : i32 to vector<32x16xi32>
    %24 = arith.addi %22, %23 : vector<32x16xi32>
    %25 = arith.cmpi eq, %14, %24 : vector<32x16xi32>
    %26 = arith.extui %25 : vector<32x16xi1> to vector<32x16xi32>
    %27 = arith.sitofp %26 : vector<32x16xi32> to vector<32x16xf32>
    %c0 = arith.constant 0 : index
    %c0_4 = arith.constant 0 : index
    %c0_5 = arith.constant 0 : index
    %c0_6 = arith.constant 0 : index
    %28 = vector.load %arg4[%c0, %c0_4, %c0_5, %c0_6] : memref<1x4x16x16xf32, #tpu.memory_space<vmem>>, vector<1x1x16x16xf32>
    %29 = vector.shape_cast %28 : vector<1x1x16x16xf32> to vector<16x16xf32>
    %c0_7 = arith.constant 0 : index
    %c1 = arith.constant 1 : index
    %c0_8 = arith.constant 0 : index
    %c0_9 = arith.constant 0 : index
    %30 = vector.load %arg4[%c0_7, %c1, %c0_8, %c0_9] : memref<1x4x16x16xf32, #tpu.memory_space<vmem>>, vector<1x1x16x16xf32>
    %31 = vector.shape_cast %30 : vector<1x1x16x16xf32> to vector<16x16xf32>
    %c0_10 = arith.constant 0 : index
    %c2 = arith.constant 2 : index
    %c0_11 = arith.constant 0 : index
    %c0_12 = arith.constant 0 : index
    %32 = vector.load %arg4[%c0_10, %c2, %c0_11, %c0_12] : memref<1x4x16x16xf32, #tpu.memory_space<vmem>>, vector<1x1x16x16xf32>
    %33 = vector.shape_cast %32 : vector<1x1x16x16xf32> to vector<16x16xf32>
    %c0_13 = arith.constant 0 : index
    %c3 = arith.constant 3 : index
    %c0_14 = arith.constant 0 : index
    %c0_15 = arith.constant 0 : index
    %34 = vector.load %arg4[%c0_13, %c3, %c0_14, %c0_15] : memref<1x4x16x16xf32, #tpu.memory_space<vmem>>, vector<1x1x16x16xf32>
    %35 = vector.shape_cast %34 : vector<1x1x16x16xf32> to vector<16x16xf32>
    %c0_16 = arith.constant 0 : index
    %36 = memref.load %arg2[%c0_16] : memref<64xf32, #tpu.memory_space<smem>>
    %37 = vector.broadcast %36 : f32 to vector<16x16xf32>
    %38 = arith.mulf %29, %37 : vector<16x16xf32>
    %c1_17 = arith.constant 1 : index
    %39 = memref.load %arg2[%c1_17] : memref<64xf32, #tpu.memory_space<smem>>
    %40 = vector.broadcast %39 : f32 to vector<16x16xf32>
    %41 = arith.mulf %29, %40 : vector<16x16xf32>
    %c16 = arith.constant 16 : index
    %42 = memref.load %arg2[%c16] : memref<64xf32, #tpu.memory_space<smem>>
    %43 = vector.broadcast %42 : f32 to vector<16x16xf32>
    %44 = arith.mulf %31, %43 : vector<16x16xf32>
    %45 = arith.addf %38, %44 : vector<16x16xf32>
    %c17 = arith.constant 17 : index
    %46 = memref.load %arg2[%c17] : memref<64xf32, #tpu.memory_space<smem>>
    %47 = vector.broadcast %46 : f32 to vector<16x16xf32>
    %48 = arith.mulf %31, %47 : vector<16x16xf32>
    %49 = arith.addf %41, %48 : vector<16x16xf32>
    %c32 = arith.constant 32 : index
    %50 = memref.load %arg2[%c32] : memref<64xf32, #tpu.memory_space<smem>>
    %51 = vector.broadcast %50 : f32 to vector<16x16xf32>
    %52 = arith.mulf %33, %51 : vector<16x16xf32>
    %53 = arith.addf %45, %52 : vector<16x16xf32>
    %c33 = arith.constant 33 : index
    %54 = memref.load %arg2[%c33] : memref<64xf32, #tpu.memory_space<smem>>
    %55 = vector.broadcast %54 : f32 to vector<16x16xf32>
    %56 = arith.mulf %33, %55 : vector<16x16xf32>
    %57 = arith.addf %49, %56 : vector<16x16xf32>
    %c48 = arith.constant 48 : index
    %58 = memref.load %arg2[%c48] : memref<64xf32, #tpu.memory_space<smem>>
    %59 = vector.broadcast %58 : f32 to vector<16x16xf32>
    %60 = arith.mulf %35, %59 : vector<16x16xf32>
    %61 = arith.addf %53, %60 : vector<16x16xf32>
    %c49 = arith.constant 49 : index
    %62 = memref.load %arg2[%c49] : memref<64xf32, #tpu.memory_space<smem>>
    %63 = vector.broadcast %62 : f32 to vector<16x16xf32>
    %64 = arith.mulf %35, %63 : vector<16x16xf32>
    %65 = arith.addf %57, %64 : vector<16x16xf32>
    %cst = arith.constant dense<0.000000e+00> : vector<16x32xf32>
    %66 = tpu.matmul %61, %6, %cst {dimension_numbers = #tpu.dot_dimension_numbers<[1], [0], [0], [1], [0, 0, 1, 1], [], []>} : vector<16x16xf32>, vector<16x32xf32>, vector<16x32xf32> -> vector<16x32xf32>
    %cst_18 = arith.constant dense<0.000000e+00> : vector<16x32xf32>
    %67 = tpu.matmul %65, %13, %cst_18 {dimension_numbers = #tpu.dot_dimension_numbers<[1], [0], [0], [1], [0, 0, 1, 1], [], []>} : vector<16x16xf32>, vector<16x32xf32>, vector<16x32xf32> -> vector<16x32xf32>
    %68 = arith.addf %66, %67 : vector<16x32xf32>
    %c2_19 = arith.constant 2 : index
    %69 = memref.load %arg2[%c2_19] : memref<64xf32, #tpu.memory_space<smem>>
    %70 = vector.broadcast %69 : f32 to vector<16x16xf32>
    %71 = arith.mulf %29, %70 : vector<16x16xf32>
    %c3_20 = arith.constant 3 : index
    %72 = memref.load %arg2[%c3_20] : memref<64xf32, #tpu.memory_space<smem>>
    %73 = vector.broadcast %72 : f32 to vector<16x16xf32>
    %74 = arith.mulf %29, %73 : vector<16x16xf32>
    %c18 = arith.constant 18 : index
    %75 = memref.load %arg2[%c18] : memref<64xf32, #tpu.memory_space<smem>>
    %76 = vector.broadcast %75 : f32 to vector<16x16xf32>
    %77 = arith.mulf %31, %76 : vector<16x16xf32>
    %78 = arith.addf %71, %77 : vector<16x16xf32>
    %c19 = arith.constant 19 : index
    %79 = memref.load %arg2[%c19] : memref<64xf32, #tpu.memory_space<smem>>
    %80 = vector.broadcast %79 : f32 to vector<16x16xf32>
    %81 = arith.mulf %31, %80 : vector<16x16xf32>
    %82 = arith.addf %74, %81 : vector<16x16xf32>
    %c34 = arith.constant 34 : index
    %83 = memref.load %arg2[%c34] : memref<64xf32, #tpu.memory_space<smem>>
    %84 = vector.broadcast %83 : f32 to vector<16x16xf32>
    %85 = arith.mulf %33, %84 : vector<16x16xf32>
    %86 = arith.addf %78, %85 : vector<16x16xf32>
    %c35 = arith.constant 35 : index
    %87 = memref.load %arg2[%c35] : memref<64xf32, #tpu.memory_space<smem>>
    %88 = vector.broadcast %87 : f32 to vector<16x16xf32>
    %89 = arith.mulf %33, %88 : vector<16x16xf32>
    %90 = arith.addf %82, %89 : vector<16x16xf32>
    %c50 = arith.constant 50 : index
    %91 = memref.load %arg2[%c50] : memref<64xf32, #tpu.memory_space<smem>>
    %92 = vector.broadcast %91 : f32 to vector<16x16xf32>
    %93 = arith.mulf %35, %92 : vector<16x16xf32>
    %94 = arith.addf %86, %93 : vector<16x16xf32>
    %c51 = arith.constant 51 : index
    %95 = memref.load %arg2[%c51] : memref<64xf32, #tpu.memory_space<smem>>
    %96 = vector.broadcast %95 : f32 to vector<16x16xf32>
    %97 = arith.mulf %35, %96 : vector<16x16xf32>
    %98 = arith.addf %90, %97 : vector<16x16xf32>
    %cst_21 = arith.constant dense<0.000000e+00> : vector<16x32xf32>
    %99 = tpu.matmul %94, %6, %cst_21 {dimension_numbers = #tpu.dot_dimension_numbers<[1], [0], [0], [1], [0, 0, 1, 1], [], []>} : vector<16x16xf32>, vector<16x32xf32>, vector<16x32xf32> -> vector<16x32xf32>
    %cst_22 = arith.constant dense<0.000000e+00> : vector<16x32xf32>
    %100 = tpu.matmul %98, %13, %cst_22 {dimension_numbers = #tpu.dot_dimension_numbers<[1], [0], [0], [1], [0, 0, 1, 1], [], []>} : vector<16x16xf32>, vector<16x32xf32>, vector<16x32xf32> -> vector<16x32xf32>
    %101 = arith.addf %99, %100 : vector<16x32xf32>
    %cst_23 = arith.constant dense<0.000000e+00> : vector<32x32xf32>
    %102 = tpu.matmul %20, %68, %cst_23 {dimension_numbers = #tpu.dot_dimension_numbers<[1], [0], [0], [1], [0, 0, 1, 1], [], []>} : vector<32x16xf32>, vector<16x32xf32>, vector<32x32xf32> -> vector<32x32xf32>
    %cst_24 = arith.constant dense<0.000000e+00> : vector<32x32xf32>
    %103 = tpu.matmul %27, %101, %cst_24 {dimension_numbers = #tpu.dot_dimension_numbers<[1], [0], [0], [1], [0, 0, 1, 1], [], []>} : vector<32x16xf32>, vector<16x32xf32>, vector<32x32xf32> -> vector<32x32xf32>
    %104 = arith.addf %102, %103 : vector<32x32xf32>
    %c0_25 = arith.constant 0 : index
    %105 = memref.load %arg3[%c0_25] : memref<4xf32, #tpu.memory_space<smem>>
    %106 = vector.broadcast %105 : f32 to vector<32x32xf32>
    %107 = arith.addf %104, %106 : vector<32x32xf32>
    %cst_26 = arith.constant 0.000000e+00 : f32
    %108 = vector.broadcast %cst_26 : f32 to vector<32x32xf32>
    %109 = arith.maximumf %107, %108 : vector<32x32xf32>
    %c0_27 = arith.constant 0 : index
    %c0_28 = arith.constant 0 : index
    %c0_29 = arith.constant 0 : index
    %c0_30 = arith.constant 0 : index
    %110 = vector.load %arg5[%c0_27, %c0_28, %c0_29, %c0_30] : memref<1x4x32x32xf32, #tpu.memory_space<vmem>>, vector<1x1x32x32xf32>
    %111 = vector.shape_cast %110 : vector<1x1x32x32xf32> to vector<32x32xf32>
    %112 = vector.shape_cast %109 : vector<32x32xf32> to vector<1x1x32x32xf32>
    tpu.vector_store %arg5[%c0_27, %c0_28, %c0_29, %c0_30], %112 {strides = array<i32>} : memref<1x4x32x32xf32, #tpu.memory_space<vmem>>, vector<1x1x32x32xf32>,
    %c4 = arith.constant 4 : index
    %113 = memref.load %arg2[%c4] : memref<64xf32, #tpu.memory_space<smem>>
    %114 = vector.broadcast %113 : f32 to vector<16x16xf32>
    %115 = arith.mulf %29, %114 : vector<16x16xf32>
    %c5 = arith.constant 5 : index
    %116 = memref.load %arg2[%c5] : memref<64xf32, #tpu.memory_space<smem>>
    %117 = vector.broadcast %116 : f32 to vector<16x16xf32>
    %118 = arith.mulf %29, %117 : vector<16x16xf32>
    %c20 = arith.constant 20 : index
    %119 = memref.load %arg2[%c20] : memref<64xf32, #tpu.memory_space<smem>>
    %120 = vector.broadcast %119 : f32 to vector<16x16xf32>
    %121 = arith.mulf %31, %120 : vector<16x16xf32>
    %122 = arith.addf %115, %121 : vector<16x16xf32>
    %c21 = arith.constant 21 : index
    %123 = memref.load %arg2[%c21] : memref<64xf32, #tpu.memory_space<smem>>
    %124 = vector.broadcast %123 : f32 to vector<16x16xf32>
    %125 = arith.mulf %31, %124 : vector<16x16xf32>
    %126 = arith.addf %118, %125 : vector<16x16xf32>
    %c36 = arith.constant 36 : index
    %127 = memref.load %arg2[%c36] : memref<64xf32, #tpu.memory_space<smem>>
    %128 = vector.broadcast %127 : f32 to vector<16x16xf32>
    %129 = arith.mulf %33, %128 : vector<16x16xf32>
    %130 = arith.addf %122, %129 : vector<16x16xf32>
    %c37 = arith.constant 37 : index
    %131 = memref.load %arg2[%c37] : memref<64xf32, #tpu.memory_space<smem>>
    %132 = vector.broadcast %131 : f32 to vector<16x16xf32>
    %133 = arith.mulf %33, %132 : vector<16x16xf32>
    %134 = arith.addf %126, %133 : vector<16x16xf32>
    %c52 = arith.constant 52 : index
    %135 = memref.load %arg2[%c52] : memref<64xf32, #tpu.memory_space<smem>>
    %136 = vector.broadcast %135 : f32 to vector<16x16xf32>
    %137 = arith.mulf %35, %136 : vector<16x16xf32>
    %138 = arith.addf %130, %137 : vector<16x16xf32>
    %c53 = arith.constant 53 : index
    %139 = memref.load %arg2[%c53] : memref<64xf32, #tpu.memory_space<smem>>
    %140 = vector.broadcast %139 : f32 to vector<16x16xf32>
    %141 = arith.mulf %35, %140 : vector<16x16xf32>
    %142 = arith.addf %134, %141 : vector<16x16xf32>
    %cst_31 = arith.constant dense<0.000000e+00> : vector<16x32xf32>
    %143 = tpu.matmul %138, %6, %cst_31 {dimension_numbers = #tpu.dot_dimension_numbers<[1], [0], [0], [1], [0, 0, 1, 1], [], []>} : vector<16x16xf32>, vector<16x32xf32>, vector<16x32xf32> -> vector<16x32xf32>
    %cst_32 = arith.constant dense<0.000000e+00> : vector<16x32xf32>
    %144 = tpu.matmul %142, %13, %cst_32 {dimension_numbers = #tpu.dot_dimension_numbers<[1], [0], [0], [1], [0, 0, 1, 1], [], []>} : vector<16x16xf32>, vector<16x32xf32>, vector<16x32xf32> -> vector<16x32xf32>
    %145 = arith.addf %143, %144 : vector<16x32xf32>
    %c6 = arith.constant 6 : index
    %146 = memref.load %arg2[%c6] : memref<64xf32, #tpu.memory_space<smem>>
    %147 = vector.broadcast %146 : f32 to vector<16x16xf32>
    %148 = arith.mulf %29, %147 : vector<16x16xf32>
    %c7 = arith.constant 7 : index
    %149 = memref.load %arg2[%c7] : memref<64xf32, #tpu.memory_space<smem>>
    %150 = vector.broadcast %149 : f32 to vector<16x16xf32>
    %151 = arith.mulf %29, %150 : vector<16x16xf32>
    %c22 = arith.constant 22 : index
    %152 = memref.load %arg2[%c22] : memref<64xf32, #tpu.memory_space<smem>>
    %153 = vector.broadcast %152 : f32 to vector<16x16xf32>
    %154 = arith.mulf %31, %153 : vector<16x16xf32>
    %155 = arith.addf %148, %154 : vector<16x16xf32>
    %c23 = arith.constant 23 : index
    %156 = memref.load %arg2[%c23] : memref<64xf32, #tpu.memory_space<smem>>
    %157 = vector.broadcast %156 : f32 to vector<16x16xf32>
    %158 = arith.mulf %31, %157 : vector<16x16xf32>
    %159 = arith.addf %151, %158 : vector<16x16xf32>
    %c38 = arith.constant 38 : index
    %160 = memref.load %arg2[%c38] : memref<64xf32, #tpu.memory_space<smem>>
    %161 = vector.broadcast %160 : f32 to vector<16x16xf32>
    %162 = arith.mulf %33, %161 : vector<16x16xf32>
    %163 = arith.addf %155, %162 : vector<16x16xf32>
    %c39 = arith.constant 39 : index
    %164 = memref.load %arg2[%c39] : memref<64xf32, #tpu.memory_space<smem>>
    %165 = vector.broadcast %164 : f32 to vector<16x16xf32>
    %166 = arith.mulf %33, %165 : vector<16x16xf32>
    %167 = arith.addf %159, %166 : vector<16x16xf32>
    %c54 = arith.constant 54 : index
    %168 = memref.load %arg2[%c54] : memref<64xf32, #tpu.memory_space<smem>>
    %169 = vector.broadcast %168 : f32 to vector<16x16xf32>
    %170 = arith.mulf %35, %169 : vector<16x16xf32>
    %171 = arith.addf %163, %170 : vector<16x16xf32>
    %c55 = arith.constant 55 : index
    %172 = memref.load %arg2[%c55] : memref<64xf32, #tpu.memory_space<smem>>
    %173 = vector.broadcast %172 : f32 to vector<16x16xf32>
    %174 = arith.mulf %35, %173 : vector<16x16xf32>
    %175 = arith.addf %167, %174 : vector<16x16xf32>
    %cst_33 = arith.constant dense<0.000000e+00> : vector<16x32xf32>
    %176 = tpu.matmul %171, %6, %cst_33 {dimension_numbers = #tpu.dot_dimension_numbers<[1], [0], [0], [1], [0, 0, 1, 1], [], []>} : vector<16x16xf32>, vector<16x32xf32>, vector<16x32xf32> -> vector<16x32xf32>
    %cst_34 = arith.constant dense<0.000000e+00> : vector<16x32xf32>
    %177 = tpu.matmul %175, %13, %cst_34 {dimension_numbers = #tpu.dot_dimension_numbers<[1], [0], [0], [1], [0, 0, 1, 1], [], []>} : vector<16x16xf32>, vector<16x32xf32>, vector<16x32xf32> -> vector<16x32xf32>
    %178 = arith.addf %176, %177 : vector<16x32xf32>
    %cst_35 = arith.constant dense<0.000000e+00> : vector<32x32xf32>
    %179 = tpu.matmul %20, %145, %cst_35 {dimension_numbers = #tpu.dot_dimension_numbers<[1], [0], [0], [1], [0, 0, 1, 1], [], []>} : vector<32x16xf32>, vector<16x32xf32>, vector<32x32xf32> -> vector<32x32xf32>
    %cst_36 = arith.constant dense<0.000000e+00> : vector<32x32xf32>
    %180 = tpu.matmul %27, %178, %cst_36 {dimension_numbers = #tpu.dot_dimension_numbers<[1], [0], [0], [1], [0, 0, 1, 1], [], []>} : vector<32x16xf32>, vector<16x32xf32>, vector<32x32xf32> -> vector<32x32xf32>
    %181 = arith.addf %179, %180 : vector<32x32xf32>
    %c1_37 = arith.constant 1 : index
    %182 = memref.load %arg3[%c1_37] : memref<4xf32, #tpu.memory_space<smem>>
    %183 = vector.broadcast %182 : f32 to vector<32x32xf32>
    %184 = arith.addf %181, %183 : vector<32x32xf32>
    %cst_38 = arith.constant 0.000000e+00 : f32
    %185 = vector.broadcast %cst_38 : f32 to vector<32x32xf32>
    %186 = arith.maximumf %184, %185 : vector<32x32xf32>
    %c0_39 = arith.constant 0 : index
    %c1_40 = arith.constant 1 : index
    %c0_41 = arith.constant 0 : index
    %c0_42 = arith.constant 0 : index
    %187 = vector.load %arg5[%c0_39, %c1_40, %c0_41, %c0_42] : memref<1x4x32x32xf32, #tpu.memory_space<vmem>>, vector<1x1x32x32xf32>
    %188 = vector.shape_cast %187 : vector<1x1x32x32xf32> to vector<32x32xf32>
    %189 = vector.shape_cast %186 : vector<32x32xf32> to vector<1x1x32x32xf32>
    tpu.vector_store %arg5[%c0_39, %c1_40, %c0_41, %c0_42], %189 {strides = array<i32>} : memref<1x4x32x32xf32, #tpu.memory_space<vmem>>, vector<1x1x32x32xf32>,
    %c8 = arith.constant 8 : index
    %190 = memref.load %arg2[%c8] : memref<64xf32, #tpu.memory_space<smem>>
    %191 = vector.broadcast %190 : f32 to vector<16x16xf32>
    %192 = arith.mulf %29, %191 : vector<16x16xf32>
    %c9 = arith.constant 9 : index
    %193 = memref.load %arg2[%c9] : memref<64xf32, #tpu.memory_space<smem>>
    %194 = vector.broadcast %193 : f32 to vector<16x16xf32>
    %195 = arith.mulf %29, %194 : vector<16x16xf32>
    %c24 = arith.constant 24 : index
    %196 = memref.load %arg2[%c24] : memref<64xf32, #tpu.memory_space<smem>>
    %197 = vector.broadcast %196 : f32 to vector<16x16xf32>
    %198 = arith.mulf %31, %197 : vector<16x16xf32>
    %199 = arith.addf %192, %198 : vector<16x16xf32>
    %c25 = arith.constant 25 : index
    %200 = memref.load %arg2[%c25] : memref<64xf32, #tpu.memory_space<smem>>
    %201 = vector.broadcast %200 : f32 to vector<16x16xf32>
    %202 = arith.mulf %31, %201 : vector<16x16xf32>
    %203 = arith.addf %195, %202 : vector<16x16xf32>
    %c40 = arith.constant 40 : index
    %204 = memref.load %arg2[%c40] : memref<64xf32, #tpu.memory_space<smem>>
    %205 = vector.broadcast %204 : f32 to vector<16x16xf32>
    %206 = arith.mulf %33, %205 : vector<16x16xf32>
    %207 = arith.addf %199, %206 : vector<16x16xf32>
    %c41 = arith.constant 41 : index
    %208 = memref.load %arg2[%c41] : memref<64xf32, #tpu.memory_space<smem>>
    %209 = vector.broadcast %208 : f32 to vector<16x16xf32>
    %210 = arith.mulf %33, %209 : vector<16x16xf32>
    %211 = arith.addf %203, %210 : vector<16x16xf32>
    %c56 = arith.constant 56 : index
    %212 = memref.load %arg2[%c56] : memref<64xf32, #tpu.memory_space<smem>>
    %213 = vector.broadcast %212 : f32 to vector<16x16xf32>
    %214 = arith.mulf %35, %213 : vector<16x16xf32>
    %215 = arith.addf %207, %214 : vector<16x16xf32>
    %c57 = arith.constant 57 : index
    %216 = memref.load %arg2[%c57] : memref<64xf32, #tpu.memory_space<smem>>
    %217 = vector.broadcast %216 : f32 to vector<16x16xf32>
    %218 = arith.mulf %35, %217 : vector<16x16xf32>
    %219 = arith.addf %211, %218 : vector<16x16xf32>
    %cst_43 = arith.constant dense<0.000000e+00> : vector<16x32xf32>
    %220 = tpu.matmul %215, %6, %cst_43 {dimension_numbers = #tpu.dot_dimension_numbers<[1], [0], [0], [1], [0, 0, 1, 1], [], []>} : vector<16x16xf32>, vector<16x32xf32>, vector<16x32xf32> -> vector<16x32xf32>
    %cst_44 = arith.constant dense<0.000000e+00> : vector<16x32xf32>
    %221 = tpu.matmul %219, %13, %cst_44 {dimension_numbers = #tpu.dot_dimension_numbers<[1], [0], [0], [1], [0, 0, 1, 1], [], []>} : vector<16x16xf32>, vector<16x32xf32>, vector<16x32xf32> -> vector<16x32xf32>
    %222 = arith.addf %220, %221 : vector<16x32xf32>
    %c10 = arith.constant 10 : index
    %223 = memref.load %arg2[%c10] : memref<64xf32, #tpu.memory_space<smem>>
    %224 = vector.broadcast %223 : f32 to vector<16x16xf32>
    %225 = arith.mulf %29, %224 : vector<16x16xf32>
    %c11 = arith.constant 11 : index
    %226 = memref.load %arg2[%c11] : memref<64xf32, #tpu.memory_space<smem>>
    %227 = vector.broadcast %226 : f32 to vector<16x16xf32>
    %228 = arith.mulf %29, %227 : vector<16x16xf32>
    %c26 = arith.constant 26 : index
    %229 = memref.load %arg2[%c26] : memref<64xf32, #tpu.memory_space<smem>>
    %230 = vector.broadcast %229 : f32 to vector<16x16xf32>
    %231 = arith.mulf %31, %230 : vector<16x16xf32>
    %232 = arith.addf %225, %231 : vector<16x16xf32>
    %c27 = arith.constant 27 : index
    %233 = memref.load %arg2[%c27] : memref<64xf32, #tpu.memory_space<smem>>
    %234 = vector.broadcast %233 : f32 to vector<16x16xf32>
    %235 = arith.mulf %31, %234 : vector<16x16xf32>
    %236 = arith.addf %228, %235 : vector<16x16xf32>
    %c42 = arith.constant 42 : index
    %237 = memref.load %arg2[%c42] : memref<64xf32, #tpu.memory_space<smem>>
    %238 = vector.broadcast %237 : f32 to vector<16x16xf32>
    %239 = arith.mulf %33, %238 : vector<16x16xf32>
    %240 = arith.addf %232, %239 : vector<16x16xf32>
    %c43 = arith.constant 43 : index
    %241 = memref.load %arg2[%c43] : memref<64xf32, #tpu.memory_space<smem>>
    %242 = vector.broadcast %241 : f32 to vector<16x16xf32>
    %243 = arith.mulf %33, %242 : vector<16x16xf32>
    %244 = arith.addf %236, %243 : vector<16x16xf32>
    %c58 = arith.constant 58 : index
    %245 = memref.load %arg2[%c58] : memref<64xf32, #tpu.memory_space<smem>>
    %246 = vector.broadcast %245 : f32 to vector<16x16xf32>
    %247 = arith.mulf %35, %246 : vector<16x16xf32>
    %248 = arith.addf %240, %247 : vector<16x16xf32>
    %c59 = arith.constant 59 : index
    %249 = memref.load %arg2[%c59] : memref<64xf32, #tpu.memory_space<smem>>
    %250 = vector.broadcast %249 : f32 to vector<16x16xf32>
    %251 = arith.mulf %35, %250 : vector<16x16xf32>
    %252 = arith.addf %244, %251 : vector<16x16xf32>
    %cst_45 = arith.constant dense<0.000000e+00> : vector<16x32xf32>
    %253 = tpu.matmul %248, %6, %cst_45 {dimension_numbers = #tpu.dot_dimension_numbers<[1], [0], [0], [1], [0, 0, 1, 1], [], []>} : vector<16x16xf32>, vector<16x32xf32>, vector<16x32xf32> -> vector<16x32xf32>
    %cst_46 = arith.constant dense<0.000000e+00> : vector<16x32xf32>
    %254 = tpu.matmul %252, %13, %cst_46 {dimension_numbers = #tpu.dot_dimension_numbers<[1], [0], [0], [1], [0, 0, 1, 1], [], []>} : vector<16x16xf32>, vector<16x32xf32>, vector<16x32xf32> -> vector<16x32xf32>
    %255 = arith.addf %253, %254 : vector<16x32xf32>
    %cst_47 = arith.constant dense<0.000000e+00> : vector<32x32xf32>
    %256 = tpu.matmul %20, %222, %cst_47 {dimension_numbers = #tpu.dot_dimension_numbers<[1], [0], [0], [1], [0, 0, 1, 1], [], []>} : vector<32x16xf32>, vector<16x32xf32>, vector<32x32xf32> -> vector<32x32xf32>
    %cst_48 = arith.constant dense<0.000000e+00> : vector<32x32xf32>
    %257 = tpu.matmul %27, %255, %cst_48 {dimension_numbers = #tpu.dot_dimension_numbers<[1], [0], [0], [1], [0, 0, 1, 1], [], []>} : vector<32x16xf32>, vector<16x32xf32>, vector<32x32xf32> -> vector<32x32xf32>
    %258 = arith.addf %256, %257 : vector<32x32xf32>
    %c2_49 = arith.constant 2 : index
    %259 = memref.load %arg3[%c2_49] : memref<4xf32, #tpu.memory_space<smem>>
    %260 = vector.broadcast %259 : f32 to vector<32x32xf32>
    %261 = arith.addf %258, %260 : vector<32x32xf32>
    %cst_50 = arith.constant 0.000000e+00 : f32
    %262 = vector.broadcast %cst_50 : f32 to vector<32x32xf32>
    %263 = arith.maximumf %261, %262 : vector<32x32xf32>
    %c0_51 = arith.constant 0 : index
    %c2_52 = arith.constant 2 : index
    %c0_53 = arith.constant 0 : index
    %c0_54 = arith.constant 0 : index
    %264 = vector.load %arg5[%c0_51, %c2_52, %c0_53, %c0_54] : memref<1x4x32x32xf32, #tpu.memory_space<vmem>>, vector<1x1x32x32xf32>
    %265 = vector.shape_cast %264 : vector<1x1x32x32xf32> to vector<32x32xf32>
    %266 = vector.shape_cast %263 : vector<32x32xf32> to vector<1x1x32x32xf32>
    tpu.vector_store %arg5[%c0_51, %c2_52, %c0_53, %c0_54], %266 {strides = array<i32>} : memref<1x4x32x32xf32, #tpu.memory_space<vmem>>, vector<1x1x32x32xf32>,
    %c12 = arith.constant 12 : index
    %267 = memref.load %arg2[%c12] : memref<64xf32, #tpu.memory_space<smem>>
    %268 = vector.broadcast %267 : f32 to vector<16x16xf32>
    %269 = arith.mulf %29, %268 : vector<16x16xf32>
    %c13 = arith.constant 13 : index
    %270 = memref.load %arg2[%c13] : memref<64xf32, #tpu.memory_space<smem>>
    %271 = vector.broadcast %270 : f32 to vector<16x16xf32>
    %272 = arith.mulf %29, %271 : vector<16x16xf32>
    %c28 = arith.constant 28 : index
    %273 = memref.load %arg2[%c28] : memref<64xf32, #tpu.memory_space<smem>>
    %274 = vector.broadcast %273 : f32 to vector<16x16xf32>
    %275 = arith.mulf %31, %274 : vector<16x16xf32>
    %276 = arith.addf %269, %275 : vector<16x16xf32>
    %c29 = arith.constant 29 : index
    %277 = memref.load %arg2[%c29] : memref<64xf32, #tpu.memory_space<smem>>
    %278 = vector.broadcast %277 : f32 to vector<16x16xf32>
    %279 = arith.mulf %31, %278 : vector<16x16xf32>
    %280 = arith.addf %272, %279 : vector<16x16xf32>
    %c44 = arith.constant 44 : index
    %281 = memref.load %arg2[%c44] : memref<64xf32, #tpu.memory_space<smem>>
    %282 = vector.broadcast %281 : f32 to vector<16x16xf32>
    %283 = arith.mulf %33, %282 : vector<16x16xf32>
    %284 = arith.addf %276, %283 : vector<16x16xf32>
    %c45 = arith.constant 45 : index
    %285 = memref.load %arg2[%c45] : memref<64xf32, #tpu.memory_space<smem>>
    %286 = vector.broadcast %285 : f32 to vector<16x16xf32>
    %287 = arith.mulf %33, %286 : vector<16x16xf32>
    %288 = arith.addf %280, %287 : vector<16x16xf32>
    %c60 = arith.constant 60 : index
    %289 = memref.load %arg2[%c60] : memref<64xf32, #tpu.memory_space<smem>>
    %290 = vector.broadcast %289 : f32 to vector<16x16xf32>
    %291 = arith.mulf %35, %290 : vector<16x16xf32>
    %292 = arith.addf %284, %291 : vector<16x16xf32>
    %c61 = arith.constant 61 : index
    %293 = memref.load %arg2[%c61] : memref<64xf32, #tpu.memory_space<smem>>
    %294 = vector.broadcast %293 : f32 to vector<16x16xf32>
    %295 = arith.mulf %35, %294 : vector<16x16xf32>
    %296 = arith.addf %288, %295 : vector<16x16xf32>
    %cst_55 = arith.constant dense<0.000000e+00> : vector<16x32xf32>
    %297 = tpu.matmul %292, %6, %cst_55 {dimension_numbers = #tpu.dot_dimension_numbers<[1], [0], [0], [1], [0, 0, 1, 1], [], []>} : vector<16x16xf32>, vector<16x32xf32>, vector<16x32xf32> -> vector<16x32xf32>
    %cst_56 = arith.constant dense<0.000000e+00> : vector<16x32xf32>
    %298 = tpu.matmul %296, %13, %cst_56 {dimension_numbers = #tpu.dot_dimension_numbers<[1], [0], [0], [1], [0, 0, 1, 1], [], []>} : vector<16x16xf32>, vector<16x32xf32>, vector<16x32xf32> -> vector<16x32xf32>
    %299 = arith.addf %297, %298 : vector<16x32xf32>
    %c14 = arith.constant 14 : index
    %300 = memref.load %arg2[%c14] : memref<64xf32, #tpu.memory_space<smem>>
    %301 = vector.broadcast %300 : f32 to vector<16x16xf32>
    %302 = arith.mulf %29, %301 : vector<16x16xf32>
    %c15 = arith.constant 15 : index
    %303 = memref.load %arg2[%c15] : memref<64xf32, #tpu.memory_space<smem>>
    %304 = vector.broadcast %303 : f32 to vector<16x16xf32>
    %305 = arith.mulf %29, %304 : vector<16x16xf32>
    %c30 = arith.constant 30 : index
    %306 = memref.load %arg2[%c30] : memref<64xf32, #tpu.memory_space<smem>>
    %307 = vector.broadcast %306 : f32 to vector<16x16xf32>
    %308 = arith.mulf %31, %307 : vector<16x16xf32>
    %309 = arith.addf %302, %308 : vector<16x16xf32>
    %c31 = arith.constant 31 : index
    %310 = memref.load %arg2[%c31] : memref<64xf32, #tpu.memory_space<smem>>
    %311 = vector.broadcast %310 : f32 to vector<16x16xf32>
    %312 = arith.mulf %31, %311 : vector<16x16xf32>
    %313 = arith.addf %305, %312 : vector<16x16xf32>
    %c46 = arith.constant 46 : index
    %314 = memref.load %arg2[%c46] : memref<64xf32, #tpu.memory_space<smem>>
    %315 = vector.broadcast %314 : f32 to vector<16x16xf32>
    %316 = arith.mulf %33, %315 : vector<16x16xf32>
    %317 = arith.addf %309, %316 : vector<16x16xf32>
    %c47 = arith.constant 47 : index
    %318 = memref.load %arg2[%c47] : memref<64xf32, #tpu.memory_space<smem>>
    %319 = vector.broadcast %318 : f32 to vector<16x16xf32>
    %320 = arith.mulf %33, %319 : vector<16x16xf32>
    %321 = arith.addf %313, %320 : vector<16x16xf32>
    %c62 = arith.constant 62 : index
    %322 = memref.load %arg2[%c62] : memref<64xf32, #tpu.memory_space<smem>>
    %323 = vector.broadcast %322 : f32 to vector<16x16xf32>
    %324 = arith.mulf %35, %323 : vector<16x16xf32>
    %325 = arith.addf %317, %324 : vector<16x16xf32>
    %c63 = arith.constant 63 : index
    %326 = memref.load %arg2[%c63] : memref<64xf32, #tpu.memory_space<smem>>
    %327 = vector.broadcast %326 : f32 to vector<16x16xf32>
    %328 = arith.mulf %35, %327 : vector<16x16xf32>
    %329 = arith.addf %321, %328 : vector<16x16xf32>
    %cst_57 = arith.constant dense<0.000000e+00> : vector<16x32xf32>
    %330 = tpu.matmul %325, %6, %cst_57 {dimension_numbers = #tpu.dot_dimension_numbers<[1], [0], [0], [1], [0, 0, 1, 1], [], []>} : vector<16x16xf32>, vector<16x32xf32>, vector<16x32xf32> -> vector<16x32xf32>
    %cst_58 = arith.constant dense<0.000000e+00> : vector<16x32xf32>
    %331 = tpu.matmul %329, %13, %cst_58 {dimension_numbers = #tpu.dot_dimension_numbers<[1], [0], [0], [1], [0, 0, 1, 1], [], []>} : vector<16x16xf32>, vector<16x32xf32>, vector<16x32xf32> -> vector<16x32xf32>
    %332 = arith.addf %330, %331 : vector<16x32xf32>
    %cst_59 = arith.constant dense<0.000000e+00> : vector<32x32xf32>
    %333 = tpu.matmul %20, %299, %cst_59 {dimension_numbers = #tpu.dot_dimension_numbers<[1], [0], [0], [1], [0, 0, 1, 1], [], []>} : vector<32x16xf32>, vector<16x32xf32>, vector<32x32xf32> -> vector<32x32xf32>
    %cst_60 = arith.constant dense<0.000000e+00> : vector<32x32xf32>
    %334 = tpu.matmul %27, %332, %cst_60 {dimension_numbers = #tpu.dot_dimension_numbers<[1], [0], [0], [1], [0, 0, 1, 1], [], []>} : vector<32x16xf32>, vector<16x32xf32>, vector<32x32xf32> -> vector<32x32xf32>
    %335 = arith.addf %333, %334 : vector<32x32xf32>
    %c3_61 = arith.constant 3 : index
    %336 = memref.load %arg3[%c3_61] : memref<4xf32, #tpu.memory_space<smem>>
    %337 = vector.broadcast %336 : f32 to vector<32x32xf32>
    %338 = arith.addf %335, %337 : vector<32x32xf32>
    %cst_62 = arith.constant 0.000000e+00 : f32
    %339 = vector.broadcast %cst_62 : f32 to vector<32x32xf32>
    %340 = arith.maximumf %338, %339 : vector<32x32xf32>
    %c0_63 = arith.constant 0 : index
    %c3_64 = arith.constant 3 : index
    %c0_65 = arith.constant 0 : index
    %c0_66 = arith.constant 0 : index
    %341 = vector.load %arg5[%c0_63, %c3_64, %c0_65, %c0_66] : memref<1x4x32x32xf32, #tpu.memory_space<vmem>>, vector<1x1x32x32xf32>
    %342 = vector.shape_cast %341 : vector<1x1x32x32xf32> to vector<32x32xf32>
    %343 = vector.shape_cast %340 : vector<32x32xf32> to vector<1x1x32x32xf32>
    tpu.vector_store %arg5[%c0_63, %c3_64, %c0_65, %c0_66], %343 {strides = array<i32>} : memref<1x4x32x32xf32, #tpu.memory_space<vmem>>, vector<1x1x32x32xf32>,
    return
  }
  func.func @transform_0(%arg0: i32, %arg1: i32) -> i32 {
    %c0_i32 = arith.constant 0 : i32
    %c0_i32_0 = arith.constant 0 : i32
    return %c0_i32 : i32
  }
  func.func @transform_1(%arg0: i32, %arg1: i32) -> i32 {
    %c0_i32 = arith.constant 0 : i32
    %c0_i32_0 = arith.constant 0 : i32
    return %c0_i32 : i32
  }
  func.func @transform_2(%arg0: i32, %arg1: i32) -> (i32, i32, i32, i32) {
    %c0_i32 = arith.constant 0 : i32
    %c0_i32_0 = arith.constant 0 : i32
    %c0_i32_1 = arith.constant 0 : i32
    return %arg0, %c0_i32, %arg1, %c0_i32_0 : i32, i32, i32, i32
  }
  func.func @transform_3(%arg0: i32, %arg1: i32) -> (i32, i32, i32, i32) {
    %c0_i32 = arith.constant 0 : i32
    %c0_i32_0 = arith.constant 0 : i32
    %c0_i32_1 = arith.constant 0 : i32
    return %arg0, %c0_i32, %arg1, %c0_i32_0 : i32, i32, i32, i32
  }
}

</mosaic_0001>

<llo_original>
// kernel: up_forward.1
$region0: #{up_forward.1}
  #allocation0 [shape = 'u32[]', space=smem, size = 0x4, offset = 0x4, fixed_abs, tag = 'smem constant byte address 0x4 - core index']
  #allocation1 [shape = 'u32[72,128]{1,0:T(1,128)}', space=vmem, size = 0x9000, scoped, tag = 'internal scratch']
  %s0 = inlined_call_operand.vmem [shape: f32[64], index: 0, kind: input, shape index: {}]
  %s1 = inlined_call_operand.vmem [shape: f32[4], index: 1, kind: input, shape index: {}]
  %s2 = inlined_call_operand.hbm [shape: f32[2,4,16,16], index: 2, kind: input, shape index: {}]
  %s3 = inlined_call_operand.hbm [shape: f32[2,4,32,32], index: 3, kind: output, shape index: {}]
  %s4 = sld [smem:[#allocation0]]
  $region57: #{up_forward.1} parent=0
    _
  %s6 = ssub.s32 1, %s4
  %s7 = scalar_select 0, %s6, %s4
  $region1: #{up_forward.1} parent=0
    #allocation2 [shape = 'u8[512]{0}', space=smem, size = 0x200, scoped, tag = 'input window, operand 0, single buffered']
    #allocation3 [shape = 's32[2]{0}', space=sflag, size = 0x8, scoped, tag = 'scoped memory for up_forward.1']
    #allocation4 [shape = 's32[2]{0}', space=sflag, size = 0x8, scoped, tag = 'scoped memory for up_forward.1']
    #allocation5 [shape = 's32[2]{0}', space=sflag, size = 0x8, scoped, tag = 'scoped memory for up_forward.1']
    #allocation6 [shape = 'u8[512]{0}', space=smem, size = 0x200, scoped, tag = 'input window, operand 1, single buffered']
    #allocation7 [shape = 's32[1]{0}', space=sflag, size = 0x4, scoped, tag = 'scoped memory for up_forward.1']
    #allocation8 [shape = 'u8[65536]{0}', space=vmem, size = 0x10000, scoped, tag = 'input window, operand 2']
    #allocation9 [shape = 'u8[131072]{0}', space=vmem, size = 0x20000, scoped, tag = 'output window, operand 0']
    %8 = vsyncpa [#allocation5], 0
    %9 = vsyncpa [#allocation7], 0
    %10 = vsyncpa [#allocation3], 0
    %s11 = scalar_lea.sflag [#allocation3], 1
    %12 = vsyncpa %s11, 0
    %13 = vsyncpa [#allocation4], 0
    %s14 = scalar_lea.sflag [#allocation4], 1
    %15 = vsyncpa %s14, 0
    loop: start=0, step=1, limit=4
    $region2: #{up_forward.1} parent=1 // loop_pre_header
      _
    $region3: #{up_forward.1} parent=1 // loop_header
      %s17 = sphi 0, %s21
      %p18 = scmp.ge.s32.totalorder %s17, 4
      %s24 = sphi 0, %s36
      %s25 = sphi 0, %s32
      %s26 = sphi 0, %s24
      %s27 = sphi 0, %s25
      %s28 = sphi 0, %s26
      %s29 = sphi 0, %s27
      %s37 = sphi 0, %s37
      %s39 = sphi 0, %s37
      %s40 = sphi 0, %s39
      %s54 = sphi 0, %s40
      %s58 = sphi 0, %s58
      %s60 = sphi 0, %s58
      %s61 = sphi 0, %s60
      %s75 = sphi 0, %s61
      %s83 = sphi 0, %s85
      %s86 = sphi 0, %s83
      %s87 = sphi 0, %s86
      %s103 = sphi 0, %s87
      %s111 = sphi 0, %s113
      %s114 = sphi 0, %s111
      %s115 = sphi 0, %s114
      %s131 = sphi 0, %s115
    $region4: #{up_forward.1} parent=1 // loop_header_branch
      %20 = sbr.rel (%p18) target = $region8
    $region5: #{up_forward.1} parent=1 // loop_body
      %s22 = ssub.s32 %s17, 1
      %s23 = ssub.s32 %s17, 2
      %s30 = sadd.s32 1, %s25
      %p31 = scmp.ge.s32.totalorder %s30, 1
      %s32 = scalar_select %p31, 0, %s30
      %s33 = sadd.s32 1, %s24
      %s34 = scalar_select %p31, %s33, %s24
      %p35 = scmp.ge.s32.totalorder %s34, 2
      %s36 = scalar_select %p35, 0, %s34
      %s38 = sadd.s32 %s37, 1
      %p41 = scmp.eq.s32.totalorder %s17, 1
      %p42 = scmp.ne.s32.totalorder %s37, %s39
      %p43 = scmp.eq.s32.totalorder %s17, 0
      %p44 = por %p42, %p43
      %p45 = scmp.ne.s32.totalorder %s37, %s39
      %p46 = scmp.eq.s32.totalorder %s22, 1
      %p47 = por %p45, %p46
      %p48 = scmp.ne.s32.totalorder %s39, %s40
      %p49 = scmp.eq.s32.totalorder %s22, 0
      %p50 = por %p48, %p49
      %p51 = scmp.ne.s32.totalorder %s39, %s40
      %p52 = scmp.eq.s32.totalorder %s23, 1
      %p53 = por %p51, %p52
      %p55 = scmp.ne.s32.totalorder %s40, %s54
      %p56 = scmp.eq.s32.totalorder %s23, 0
      %p57 = por %p55, %p56
      %s59 = sadd.s32 %s58, 1
      %p62 = scmp.eq.s32.totalorder %s17, 1
      %p63 = scmp.ne.s32.totalorder %s58, %s60
      %p64 = scmp.eq.s32.totalorder %s17, 0
      %p65 = por %p63, %p64
      %p66 = scmp.ne.s32.totalorder %s58, %s60
      %p67 = scmp.eq.s32.totalorder %s22, 1
      %p68 = por %p66, %p67
      %p69 = scmp.ne.s32.totalorder %s60, %s61
      %p70 = scmp.eq.s32.totalorder %s22, 0
      %p71 = por %p69, %p70
      %p72 = scmp.ne.s32.totalorder %s60, %s61
      %p73 = scmp.eq.s32.totalorder %s23, 1
      %p74 = por %p72, %p73
      %p76 = scmp.ne.s32.totalorder %s61, %s75
      %p77 = scmp.eq.s32.totalorder %s23, 0
      %p78 = por %p76, %p77
      %s79 = ssub.s32 %s24, %s36
      %s80 = ssub.s32 %s25, %s32
      %s81 = sor.u32 %s79, %s80
      %p82 = scmp.eq.s32.totalorder %s81, 0
      %s84 = sadd.s32 %s83, 1
      %s85 = scalar_select %p82, %s83, %s84
      %p88 = pneg %p82
      %p89 = scmp.eq.s32.totalorder %s17, 1
      %p90 = por %p88, %p89
      %p91 = scmp.ne.s32.totalorder %s83, %s86
      %p92 = scmp.eq.s32.totalorder %s17, 0
      %p93 = por %p91, %p92
      %p94 = scmp.ne.s32.totalorder %s83, %s86
      %p95 = scmp.eq.s32.totalorder %s22, 1
      %p96 = por %p94, %p95
      %p97 = scmp.ne.s32.totalorder %s86, %s87
      %p98 = scmp.eq.s32.totalorder %s22, 0
      %p99 = por %p97, %p98
      %p100 = scmp.ne.s32.totalorder %s86, %s87
      %p101 = scmp.eq.s32.totalorder %s23, 1
      %p102 = por %p100, %p101
      %p104 = scmp.ne.s32.totalorder %s87, %s103
      %p105 = scmp.eq.s32.totalorder %s23, 0
      %p106 = por %p104, %p105
      %s107 = ssub.s32 %s24, %s36
      %s108 = ssub.s32 %s25, %s32
      %s109 = sor.u32 %s107, %s108
      %p110 = scmp.eq.s32.totalorder %s109, 0
      %s112 = sadd.s32 %s111, 1
      %s113 = scalar_select %p110, %s111, %s112
      %p116 = pneg %p110
      %p117 = scmp.eq.s32.totalorder %s17, 1
      %p118 = por %p116, %p117
      %p119 = scmp.ne.s32.totalorder %s111, %s114
      %p120 = scmp.eq.s32.totalorder %s17, 0
      %p121 = por %p119, %p120
      %p122 = scmp.ne.s32.totalorder %s111, %s114
      %p123 = scmp.eq.s32.totalorder %s22, 1
      %p124 = por %p122, %p123
      %p125 = scmp.ne.s32.totalorder %s114, %s115
      %p126 = scmp.eq.s32.totalorder %s22, 0
      %p127 = por %p125, %p126
      %p128 = scmp.ne.s32.totalorder %s114, %s115
      %p129 = scmp.eq.s32.totalorder %s23, 1
      %p130 = por %p128, %p129
      %p132 = scmp.ne.s32.totalorder %s115, %s131
      %p133 = scmp.eq.s32.totalorder %s23, 0
      %p134 = por %p132, %p133
      %p135 = scmp.le.s32.totalorder 1, %s17
      %p136 = scmp.lt.s32.totalorder %s17, 3
      %p137 = pnand %p135, %p136
      %p138 = pneg %p137
      // Predicated region
      $region9: #{up_forward.1} parent=5 // pred_check
        _
      $region10: #{up_forward.1} parent=5 // pred_check_branch
        %140 = sbr.rel (%p137) target = $region12
      $region11: #{up_forward.1} parent=5 // pred_region
        %s141 = ssub.s32 %s17, 1
        // Predicated region
        $region13: #{up_forward.1} parent=11 // pred_check
          %p142 = pneg %p50
        $region14: #{up_forward.1} parent=11 // pred_check_branch
          %144 = sbr.rel (%p142) target = $region16
        $region15: #{up_forward.1} parent=11 // pred_region
          %146 = vsyncadd [#allocation5], 0
          %s148 = sshll.u32 %s0, 4
          %s149 = int_to_ptr.vmem [resolvable:$true] %s148
          %151 = dma.vmem_to_smem %s149, 16, [#allocation2], [#allocation5]
        $region16: #{up_forward.1} parent=11 // pred_fallthru
          _
        // Predicated region
        $region17: #{up_forward.1} parent=11 // pred_check
          %p152 = pneg %p71
        $region18: #{up_forward.1} parent=11 // pred_check_branch
          %154 = sbr.rel (%p152) target = $region20
        $region19: #{up_forward.1} parent=11 // pred_region
          %156 = vsyncadd [#allocation7], 0
          %s158 = sshll.u32 %s1, 4
          %s159 = int_to_ptr.vmem [resolvable:$true] %s158
          %161 = dma.vmem_to_smem %s159, 16, [#allocation6], [#allocation7]
        $region20: #{up_forward.1} parent=11 // pred_fallthru
          _
      $region12: #{up_forward.1} parent=5 // pred_fallthru
        _
      %p162 = scmp.lt.s32.totalorder %s17, 2
      // Predicated region
      $region21: #{up_forward.1} parent=5 // pred_check
        %p163 = pneg %p162
      $region22: #{up_forward.1} parent=5 // pred_check_branch
        %165 = sbr.rel (%p163) target = $region24
      $region23: #{up_forward.1} parent=5 // pred_region
        // Predicated region
        $region25: #{up_forward.1} parent=23 // pred_check
          %p166 = pneg %p93
        $region26: #{up_forward.1} parent=23 // pred_check_branch
          %168 = sbr.rel (%p166) target = $region28
        $region27: #{up_forward.1} parent=23 // pred_region
          %s169 = sand.u32 %s83, 1
          %s170 = scalar_lea.sflag [#allocation3], %s169
          %s171 = sand.u32 %s83, 1
          %s172 = smul.addr %s171, 64
          %s173 = scalar_lea.vmem [#allocation8], %s172
          %s174 = smul.u32 2, %s25
          %176 = vsyncadd %s170, 0
          %s177 = smul.addr %s24, 8
          %s178 = sadd.s32 %s174, %s177
          %s179 = smul.addr %s178, 8
          %s180 = scalar_lea.hbm %s2, %s179
          %s181 = sshll.u32 %s180, 4
          %s182 = int_to_ptr.hbm [resolvable:$true] %s181
          %s183 = sshll.u32 %s173, 4
          %s184 = int_to_ptr.vmem [resolvable:$true] %s183
          %189 = dma.hbm_to_vmem [thread:$0]  %s182, 1024, %s184, %s170, 128, 128, 8
        $region28: #{up_forward.1} parent=23 // pred_fallthru
          _
      $region24: #{up_forward.1} parent=5 // pred_fallthru
        _
      %p190 = scmp.le.s32.totalorder 1, %s17
      %p191 = scmp.lt.s32.totalorder %s17, 3
      %p192 = pnand %p190, %p191
      %p193 = pneg %p192
      // Predicated region
      $region29: #{up_forward.1} parent=5 // pred_check
        _
      $region30: #{up_forward.1} parent=5 // pred_check_branch
        %195 = sbr.rel (%p192) target = $region32
      $region31: #{up_forward.1} parent=5 // pred_region
        %s196 = ssub.s32 %s17, 1
        // Predicated region
        $region33: #{up_forward.1} parent=31 // pred_check
          %p197 = pneg %p50
        $region34: #{up_forward.1} parent=31 // pred_check_branch
          %199 = sbr.rel (%p197) target = $region36
        $region35: #{up_forward.1} parent=31 // pred_region
          %201 = dma.done [#allocation5], 16
        $region36: #{up_forward.1} parent=31 // pred_fallthru
          _
        // Predicated region
        $region37: #{up_forward.1} parent=31 // pred_check
          %p202 = pneg %p71
        $region38: #{up_forward.1} parent=31 // pred_check_branch
          %204 = sbr.rel (%p202) target = $region40
        $region39: #{up_forward.1} parent=31 // pred_region
          %206 = dma.done [#allocation7], 16
        $region40: #{up_forward.1} parent=31 // pred_fallthru
          _
        %s207 = sand.u32 %s86, 1
        %s208 = scalar_lea.sflag [#allocation3], %s207
        %s209 = sand.u32 %s86, 1
        %s210 = smul.addr %s209, 64
        %s211 = scalar_lea.vmem [#allocation8], %s210
        // Predicated region
        $region41: #{up_forward.1} parent=31 // pred_check
          %p212 = pneg %p99
        $region42: #{up_forward.1} parent=31 // pred_check_branch
          %214 = sbr.rel (%p212) target = $region44
        $region43: #{up_forward.1} parent=31 // pred_region
          %216 = dma.done %s208, 1024
        $region44: #{up_forward.1} parent=31 // pred_fallthru
          _
        %217 = sfence
        %p218 = pneg %p50
        %p219 = pneg %p47
        %p220 = pneg %p71
        %p221 = pneg %p68
        %s222 = sand.u32 %s86, 1
        %s223 = scalar_lea.sflag [#allocation3], %s222
        %s224 = sand.u32 %s86, 1
        %s225 = smul.addr %s224, 64
        %s226 = scalar_lea.vmem [#allocation8], %s225
        %p227 = pneg %p99
        %p228 = pneg %p96
        %p229 = pneg %p127
        %p230 = pneg %p124
        %s231 = sand.u32 %s114, 1
        %s232 = scalar_lea.sflag [#allocation4], %s231
        %s233 = sand.u32 %s114, 1
        %s234 = smul.addr %s233, 128
        %s235 = scalar_lea.vmem [#allocation9], %s234
        %s236 = smul.u32 2, %s27
        %s237 = smul.u32 4, %s27
        %v238 = vlaneseq
        %v239 = vshrl.u32 %v238, 7
        %v240 = vadd.s32 %v239, 8
        %v241 = vlaneseq
        %v242 = vand.u32 %v241, 127
        %v243 = vmul.u32 %v239, 2
        %v244 = vmul.u32 %v240, 2
        %vm245 = vcmp.eq.s32.totalorder %v242, %v243
        %vm246 = vcmp.eq.s32.totalorder %v242, %v244
        %v247 = vsel %vm245, 1, 0
        %v248 = vsel %vm246, 1, 0
        %v249 = vcvt.s32.f32 %v247
        %v250 = vcvt.s32.f32 %v248
        %v251 = vadd.s32 %v243, 1
        %v252 = vadd.s32 %v244, 1
        %vm253 = vcmp.eq.s32.totalorder %v242, %v251
        %vm254 = vcmp.eq.s32.totalorder %v242, %v252
        %v255 = vsel %vm253, 1, 0
        %v256 = vsel %vm254, 1, 0
        %v257 = vcvt.s32.f32 %v255
        %v258 = vcvt.s32.f32 %v256
        %v259 = vadd.s32 %v239, 16
        %v260 = vadd.s32 %v239, 24
        %v261 = vmul.u32 %v242, 2
        %vm262 = vcmp.eq.s32.totalorder %v239, %v261
        %vm263 = vcmp.eq.s32.totalorder %v240, %v261
        %vm264 = vcmp.eq.s32.totalorder %v259, %v261
        %vm265 = vcmp.eq.s32.totalorder %v260, %v261
        %v266 = vsel %vm262, 1, 0
        %v267 = vsel %vm263, 1, 0
        %v268 = vsel %vm264, 1, 0
        %v269 = vsel %vm265, 1, 0
        %v270 = vcvt.s32.f32 %v266
        %v271 = vcvt.s32.f32 %v267
        %v272 = vcvt.s32.f32 %v268
        %v273 = vcvt.s32.f32 %v269
        %v274 = vadd.s32 %v261, 1
        %vm275 = vcmp.eq.s32.totalorder %v239, %v274
        %vm276 = vcmp.eq.s32.totalorder %v240, %v274
        %vm277 = vcmp.eq.s32.totalorder %v259, %v274
        %vm278 = vcmp.eq.s32.totalorder %v260, %v274
        %v279 = vsel %vm275, 1, 0
        %v280 = vsel %vm276, 1, 0
        %v281 = vsel %vm277, 1, 0
        %v282 = vsel %vm278, 1, 0
        %v283 = vcvt.s32.f32 %v279
        %v284 = vcvt.s32.f32 %v280
        %v285 = vcvt.s32.f32 %v281
        %v286 = vcvt.s32.f32 %v282
        %v287 = vld [vmem:[%s211] sm:$0xff]
        %v288 = vld [vmem:[%s211 + $0x8] sm:$0xff]
        %s289 = scalar_lea.vmem %s211, 16 [#allocation8]
        %v290 = vld [vmem:[%s289] sm:$0xff]
        %v291 = vld [vmem:[%s289 + $0x8] sm:$0xff]
        %s292 = scalar_lea.vmem %s211, 32 [#allocation8]
        %v293 = vld [vmem:[%s292] sm:$0xff]
        %v294 = vld [vmem:[%s292 + $0x8] sm:$0xff]
        %s295 = scalar_lea.vmem %s211, 48 [#allocation8]
        %v296 = vld [vmem:[%s295] sm:$0xff]
        %v297 = vld [vmem:[%s295 + $0x8] sm:$0xff]
        %s298 = sld [smem:[#allocation2]]
        %v299 = vstv %s298
        %v300 = vmul.f32 %v287, %v299
        %v301 = vmul.f32 %v288, %v299
        %s302 = sld [smem:[#allocation2 + $0x1]]
        %v303 = vstv %s302
        %v304 = vmul.f32 %v287, %v303
        %v305 = vmul.f32 %v288, %v303
        %s306 = sld [smem:[#allocation2 + $0x10]]
        %v307 = vstv %s306
        %v308 = vmul.f32 %v290, %v307
        %v309 = vmul.f32 %v291, %v307
        %v310 = vadd.f32 %v300, %v308
        %v311 = vadd.f32 %v301, %v309
        %s312 = sld [smem:[#allocation2 + $0x11]]
        %v313 = vstv %s312
        %v314 = vmul.f32 %v290, %v313
        %v315 = vmul.f32 %v291, %v313
        %v316 = vadd.f32 %v304, %v314
        %v317 = vadd.f32 %v305, %v315
        %s318 = sld [smem:[#allocation2 + $0x20]]
        %v319 = vstv %s318
        %v320 = vmul.f32 %v293, %v319
        %v321 = vmul.f32 %v294, %v319
        %v322 = vadd.f32 %v310, %v320
        %v323 = vadd.f32 %v311, %v321
        %s324 = sld [smem:[#allocation2 + $0x21]]
        %v325 = vstv %s324
        %v326 = vmul.f32 %v293, %v325
        %v327 = vmul.f32 %v294, %v325
        %v328 = vadd.f32 %v316, %v326
        %v329 = vadd.f32 %v317, %v327
        %s330 = sld [smem:[#allocation2 + $0x30]]
        %v331 = vstv %s330
        %v332 = vmul.f32 %v296, %v331
        %v333 = vmul.f32 %v297, %v331
        %v334 = vadd.f32 %v322, %v332
        %v335 = vadd.f32 %v323, %v333
        %s336 = sld [smem:[#allocation2 + $0x31]]
        %v337 = vstv %s336
        %v338 = vmul.f32 %v296, %v337
        %v339 = vmul.f32 %v297, %v337
        %v340 = vadd.f32 %v328, %v338
        %v341 = vadd.f32 %v329, %v339
        %vm342 = vcmask 130048
        %v344 = vsel %vm342, %v340, 0
        %v347 = vsel %vm342, %v341, 0
        %349 = vmatpush.msra.mxu0 0.0
        %350 = vmatpush.msra.mxu0 0.0
        %351 = vmatpush.msra.mxu0 0.0
        %352 = vmatpush.msra.mxu0 0.0
        %353 = vmatpush.msra.mxu0 0.0
        %354 = vmatpush.msra.mxu0 0.0
        %355 = vmatpush.msra.mxu0 0.0
        %356 = vmatpush.msra.mxu0 0.0
        %357 = vmatpush.msra.mxu0 0.0
        %358 = vmatpush.msra.mxu0 0.0
        %359 = vmatpush.msra.mxu0 0.0
        %360 = vmatpush.msra.mxu0 0.0
        %361 = vmatpush.msra.mxu0 0.0
        %362 = vmatpush.msra.mxu0 0.0
        %363 = vmatpush.msra.mxu0 %v258
        %364 = vmatpush.msra.mxu0 %v257
        %365 = vmatmul.f32.gmra.mxu0 %v344
        %v366 = vpop.f32.mrf.mxu0
        %v367 = vadd.f32 0.0, %v366
        %368 = vmatmul.f32.gmra.mxu0 %v347
        %v369 = vpop.f32.mrf.mxu0
        %v370 = vadd.f32 0.0, %v369
        %371 = vdwg.mxu0
        %v373 = vsel %vm342, %v334, 0
        %v376 = vsel %vm342, %v335, 0
        %378 = vmatpush.msra.mxu0 0.0
        %379 = vmatpush.msra.mxu0 0.0
        %380 = vmatpush.msra.mxu0 0.0
        %381 = vmatpush.msra.mxu0 0.0
        %382 = vmatpush.msra.mxu0 0.0
        %383 = vmatpush.msra.mxu0 0.0
        %384 = vmatpush.msra.mxu0 0.0
        %385 = vmatpush.msra.mxu0 0.0
        %386 = vmatpush.msra.mxu0 0.0
        %387 = vmatpush.msra.mxu0 0.0
        %388 = vmatpush.msra.mxu0 0.0
        %389 = vmatpush.msra.mxu0 0.0
        %390 = vmatpush.msra.mxu0 0.0
        %391 = vmatpush.msra.mxu0 0.0
        %392 = vmatpush.msra.mxu0 %v250
        %393 = vmatpush.msra.mxu0 %v249
        %394 = vmatmul.f32.gmra.mxu0 %v373
        %v395 = vpop.f32.mrf.mxu0
        %v396 = vadd.f32 %v367, %v395
        %397 = vmatmul.f32.gmra.mxu0 %v376
        %v398 = vpop.f32.mrf.mxu0
        %v399 = vadd.f32 %v370, %v398
        %400 = vdwg.mxu0
        %s401 = sld [smem:[#allocation2 + $0x2]]
        %v402 = vstv %s401
        %v403 = vmul.f32 %v287, %v402
        %v404 = vmul.f32 %v288, %v402
        %s405 = sld [smem:[#allocation2 + $0x3]]
        %v406 = vstv %s405
        %v407 = vmul.f32 %v287, %v406
        %v408 = vmul.f32 %v288, %v406
        %s409 = sld [smem:[#allocation2 + $0x12]]
        %v410 = vstv %s409
        %v411 = vmul.f32 %v290, %v410
        %v412 = vmul.f32 %v291, %v410
        %v413 = vadd.f32 %v403, %v411
        %v414 = vadd.f32 %v404, %v412
        %s415 = sld [smem:[#allocation2 + $0x13]]
        %v416 = vstv %s415
        %v417 = vmul.f32 %v290, %v416
        %v418 = vmul.f32 %v291, %v416
        %v419 = vadd.f32 %v407, %v417
        %v420 = vadd.f32 %v408, %v418
        %s421 = sld [smem:[#allocation2 + $0x22]]
        %v422 = vstv %s421
        %v423 = vmul.f32 %v293, %v422
        %v424 = vmul.f32 %v294, %v422
        %v425 = vadd.f32 %v413, %v423
        %v426 = vadd.f32 %v414, %v424
        %s427 = sld [smem:[#allocation2 + $0x23]]
        %v428 = vstv %s427
        %v429 = vmul.f32 %v293, %v428
        %v430 = vmul.f32 %v294, %v428
        %v431 = vadd.f32 %v419, %v429
        %v432 = vadd.f32 %v420, %v430
        %s433 = sld [smem:[#allocation2 + $0x32]]
        %v434 = vstv %s433
        %v435 = vmul.f32 %v296, %v434
        %v436 = vmul.f32 %v297, %v434
        %v437 = vadd.f32 %v425, %v435
        %v438 = vadd.f32 %v426, %v436
        %s439 = sld [smem:[#allocation2 + $0x33]]
        %v440 = vstv %s439
        %v441 = vmul.f32 %v296, %v440
        %v442 = vmul.f32 %v297, %v440
        %v443 = vadd.f32 %v431, %v441
        %v444 = vadd.f32 %v432, %v442
        %v446 = vsel %vm342, %v443, 0
        %v449 = vsel %vm342, %v444, 0
        %451 = vmatpush.msra.mxu0 0.0
        %452 = vmatpush.msra.mxu0 0.0
        %453 = vmatpush.msra.mxu0 0.0
        %454 = vmatpush.msra.mxu0 0.0
        %455 = vmatpush.msra.mxu0 0.0
        %456 = vmatpush.msra.mxu0 0.0
        %457 = vmatpush.msra.mxu0 0.0
        %458 = vmatpush.msra.mxu0 0.0
        %459 = vmatpush.msra.mxu0 0.0
        %460 = vmatpush.msra.mxu0 0.0
        %461 = vmatpush.msra.mxu0 0.0
        %462 = vmatpush.msra.mxu0 0.0
        %463 = vmatpush.msra.mxu0 0.0
        %464 = vmatpush.msra.mxu0 0.0
        %465 = vmatpush.msra.mxu0 %v258
        %466 = vmatpush.msra.mxu0 %v257
        %467 = vmatmul.f32.gmra.mxu0 %v446
        %v468 = vpop.f32.mrf.mxu0
        %v469 = vadd.f32 0.0, %v468
        %470 = vmatmul.f32.gmra.mxu0 %v449
        %v471 = vpop.f32.mrf.mxu0
        %v472 = vadd.f32 0.0, %v471
        %473 = vdwg.mxu0
        %v475 = vsel %vm342, %v437, 0
        %v478 = vsel %vm342, %v438, 0
        %480 = vmatpush.msra.mxu0 0.0
        %481 = vmatpush.msra.mxu0 0.0
        %482 = vmatpush.msra.mxu0 0.0
        %483 = vmatpush.msra.mxu0 0.0
        %484 = vmatpush.msra.mxu0 0.0
        %485 = vmatpush.msra.mxu0 0.0
        %486 = vmatpush.msra.mxu0 0.0
        %487 = vmatpush.msra.mxu0 0.0
        %488 = vmatpush.msra.mxu0 0.0
        %489 = vmatpush.msra.mxu0 0.0
        %490 = vmatpush.msra.mxu0 0.0
        %491 = vmatpush.msra.mxu0 0.0
        %492 = vmatpush.msra.mxu0 0.0
        %493 = vmatpush.msra.mxu0 0.0
        %494 = vmatpush.msra.mxu0 %v250
        %495 = vmatpush.msra.mxu0 %v249
        %496 = vmatmul.f32.gmra.mxu0 %v475
        %v497 = vpop.f32.mrf.mxu0
        %v498 = vadd.f32 %v469, %v497
        %499 = vmatmul.f32.gmra.mxu0 %v478
        %v500 = vpop.f32.mrf.mxu0
        %v501 = vadd.f32 %v472, %v500
        %502 = vdwg.mxu0
        %v504 = vsel %vm342, %v283, 0
        %v507 = vsel %vm342, %v284, 0
        %v510 = vsel %vm342, %v285, 0
        %v513 = vsel %vm342, %v286, 0
        %515 = vmatpush.msra.mxu0 0.0
        %516 = vmatpush.msra.mxu0 0.0
        %517 = vmatpush.msra.mxu0 0.0
        %518 = vmatpush.msra.mxu0 0.0
        %519 = vmatpush.msra.mxu0 0.0
        %520 = vmatpush.msra.mxu0 0.0
        %521 = vmatpush.msra.mxu0 0.0
        %522 = vmatpush.msra.mxu0 0.0
        %523 = vmatpush.msra.mxu0 0.0
        %524 = vmatpush.msra.mxu0 0.0
        %525 = vmatpush.msra.mxu0 0.0
        %526 = vmatpush.msra.mxu0 0.0
        %527 = vmatpush.msra.mxu0 0.0
        %528 = vmatpush.msra.mxu0 0.0
        %529 = vmatpush.msra.mxu0 %v501
        %530 = vmatpush.msra.mxu0 %v498
        %531 = vmatmul.f32.gmra.mxu0 %v504
        %v532 = vpop.f32.mrf.mxu0
        %v533 = vadd.f32 0.0, %v532
        %534 = vmatmul.f32.gmra.mxu0 %v507
        %v535 = vpop.f32.mrf.mxu0
        %v536 = vadd.f32 0.0, %v535
        %537 = vmatmul.f32.gmra.mxu0 %v510
        %v538 = vpop.f32.mrf.mxu0
        %v539 = vadd.f32 0.0, %v538
        %540 = vmatmul.f32.gmra.mxu0 %v513
        %v541 = vpop.f32.mrf.mxu0
        %v542 = vadd.f32 0.0, %v541
        %543 = vdwg.mxu0
        %v545 = vsel %vm342, %v270, 0
        %v548 = vsel %vm342, %v271, 0
        %v551 = vsel %vm342, %v272, 0
        %v554 = vsel %vm342, %v273, 0
        %556 = vmatpush.msra.mxu0 0.0
        %557 = vmatpush.msra.mxu0 0.0
        %558 = vmatpush.msra.mxu0 0.0
        %559 = vmatpush.msra.mxu0 0.0
        %560 = vmatpush.msra.mxu0 0.0
        %561 = vmatpush.msra.mxu0 0.0
        %562 = vmatpush.msra.mxu0 0.0
        %563 = vmatpush.msra.mxu0 0.0
        %564 = vmatpush.msra.mxu0 0.0
        %565 = vmatpush.msra.mxu0 0.0
        %566 = vmatpush.msra.mxu0 0.0
        %567 = vmatpush.msra.mxu0 0.0
        %568 = vmatpush.msra.mxu0 0.0
        %569 = vmatpush.msra.mxu0 0.0
        %570 = vmatpush.msra.mxu0 %v399
        %571 = vmatpush.msra.mxu0 %v396
        %572 = vmatmul.f32.gmra.mxu0 %v545
        %v573 = vpop.f32.mrf.mxu0
        %v574 = vadd.f32 %v533, %v573
        %575 = vmatmul.f32.gmra.mxu0 %v548
        %v576 = vpop.f32.mrf.mxu0
        %v577 = vadd.f32 %v536, %v576
        %578 = vmatmul.f32.gmra.mxu0 %v551
        %v579 = vpop.f32.mrf.mxu0
        %v580 = vadd.f32 %v539, %v579
        %581 = vmatmul.f32.gmra.mxu0 %v554
        %v582 = vpop.f32.mrf.mxu0
        %v583 = vadd.f32 %v542, %v582
        %584 = vdwg.mxu0
        %s585 = sld [smem:[#allocation6]]
        %v586 = vstv %s585
        %v587 = vadd.f32 %v574, %v586
        %v588 = vadd.f32 %v577, %v586
        %v589 = vadd.f32 %v580, %v586
        %v590 = vadd.f32 %v583, %v586
        %v591 = vmax.f32 %v587, 0.0
        %v592 = vmax.f32 %v588, 0.0
        %v593 = vmax.f32 %v589, 0.0
        %v594 = vmax.f32 %v590, 0.0
        %vm595 = vcmask 261120
        %596 = vst.msk [vmem:[%s235] sm:$0xff] %vm595, %v591
        %597 = vst.msk [vmem:[%s235 + $0x8] sm:$0xff] %vm595, %v592
        %598 = vst.msk [vmem:[%s235 + $0x10] sm:$0xff] %vm595, %v593
        %599 = vst.msk [vmem:[%s235 + $0x18] sm:$0xff] %vm595, %v594
        %s600 = sld [smem:[#allocation2 + $0x4]]
        %v601 = vstv %s600
        %v602 = vmul.f32 %v287, %v601
        %v603 = vmul.f32 %v288, %v601
        %s604 = sld [smem:[#allocation2 + $0x5]]
        %v605 = vstv %s604
        %v606 = vmul.f32 %v287, %v605
        %v607 = vmul.f32 %v288, %v605
        %s608 = sld [smem:[#allocation2 + $0x14]]
        %v609 = vstv %s608
        %v610 = vmul.f32 %v290, %v609
        %v611 = vmul.f32 %v291, %v609
        %v612 = vadd.f32 %v602, %v610
        %v613 = vadd.f32 %v603, %v611
        %s614 = sld [smem:[#allocation2 + $0x15]]
        %v615 = vstv %s614
        %v616 = vmul.f32 %v290, %v615
        %v617 = vmul.f32 %v291, %v615
        %v618 = vadd.f32 %v606, %v616
        %v619 = vadd.f32 %v607, %v617
        %s620 = sld [smem:[#allocation2 + $0x24]]
        %v621 = vstv %s620
        %v622 = vmul.f32 %v293, %v621
        %v623 = vmul.f32 %v294, %v621
        %v624 = vadd.f32 %v612, %v622
        %v625 = vadd.f32 %v613, %v623
        %s626 = sld [smem:[#allocation2 + $0x25]]
        %v627 = vstv %s626
        %v628 = vmul.f32 %v293, %v627
        %v629 = vmul.f32 %v294, %v627
        %v630 = vadd.f32 %v618, %v628
        %v631 = vadd.f32 %v619, %v629
        %s632 = sld [smem:[#allocation2 + $0x34]]
        %v633 = vstv %s632
        %v634 = vmul.f32 %v296, %v633
        %v635 = vmul.f32 %v297, %v633
        %v636 = vadd.f32 %v624, %v634
        %v637 = vadd.f32 %v625, %v635
        %s638 = sld [smem:[#allocation2 + $0x35]]
        %v639 = vstv %s638
        %v640 = vmul.f32 %v296, %v639
        %v641 = vmul.f32 %v297, %v639
        %v642 = vadd.f32 %v630, %v640
        %v643 = vadd.f32 %v631, %v641
        %v645 = vsel %vm342, %v642, 0
        %v648 = vsel %vm342, %v643, 0
        %650 = vmatpush.msra.mxu0 0.0
        %651 = vmatpush.msra.mxu0 0.0
        %652 = vmatpush.msra.mxu0 0.0
        %653 = vmatpush.msra.mxu0 0.0
        %654 = vmatpush.msra.mxu0 0.0
        %655 = vmatpush.msra.mxu0 0.0
        %656 = vmatpush.msra.mxu0 0.0
        %657 = vmatpush.msra.mxu0 0.0
        %658 = vmatpush.msra.mxu0 0.0
        %659 = vmatpush.msra.mxu0 0.0
        %660 = vmatpush.msra.mxu0 0.0
        %661 = vmatpush.msra.mxu0 0.0
        %662 = vmatpush.msra.mxu0 0.0
        %663 = vmatpush.msra.mxu0 0.0
        %664 = vmatpush.msra.mxu0 %v258
        %665 = vmatpush.msra.mxu0 %v257
        %666 = vmatmul.f32.gmra.mxu0 %v645
        %v667 = vpop.f32.mrf.mxu0
        %v668 = vadd.f32 0.0, %v667
        %669 = vmatmul.f32.gmra.mxu0 %v648
        %v670 = vpop.f32.mrf.mxu0
        %v671 = vadd.f32 0.0, %v670
        %672 = vdwg.mxu0
        %v674 = vsel %vm342, %v636, 0
        %v677 = vsel %vm342, %v637, 0
        %679 = vmatpush.msra.mxu0 0.0
        %680 = vmatpush.msra.mxu0 0.0
        %681 = vmatpush.msra.mxu0 0.0
        %682 = vmatpush.msra.mxu0 0.0
        %683 = vmatpush.msra.mxu0 0.0
        %684 = vmatpush.msra.mxu0 0.0
        %685 = vmatpush.msra.mxu0 0.0
        %686 = vmatpush.msra.mxu0 0.0
        %687 = vmatpush.msra.mxu0 0.0
        %688 = vmatpush.msra.mxu0 0.0
        %689 = vmatpush.msra.mxu0 0.0
        %690 = vmatpush.msra.mxu0 0.0
        %691 = vmatpush.msra.mxu0 0.0
        %692 = vmatpush.msra.mxu0 0.0
        %693 = vmatpush.msra.mxu0 %v250
        %694 = vmatpush.msra.mxu0 %v249
        %695 = vmatmul.f32.gmra.mxu0 %v674
        %v696 = vpop.f32.mrf.mxu0
        %v697 = vadd.f32 %v668, %v696
        %698 = vmatmul.f32.gmra.mxu0 %v677
        %v699 = vpop.f32.mrf.mxu0
        %v700 = vadd.f32 %v671, %v699
        %701 = vdwg.mxu0
        %s702 = sld [smem:[#allocation2 + $0x6]]
        %v703 = vstv %s702
        %v704 = vmul.f32 %v287, %v703
        %v705 = vmul.f32 %v288, %v703
        %s706 = sld [smem:[#allocation2 + $0x7]]
        %v707 = vstv %s706
        %v708 = vmul.f32 %v287, %v707
        %v709 = vmul.f32 %v288, %v707
        %s710 = sld [smem:[#allocation2 + $0x16]]
        %v711 = vstv %s710
        %v712 = vmul.f32 %v290, %v711
        %v713 = vmul.f32 %v291, %v711
        %v714 = vadd.f32 %v704, %v712
        %v715 = vadd.f32 %v705, %v713
        %s716 = sld [smem:[#allocation2 + $0x17]]
        %v717 = vstv %s716
        %v718 = vmul.f32 %v290, %v717
        %v719 = vmul.f32 %v291, %v717
        %v720 = vadd.f32 %v708, %v718
        %v721 = vadd.f32 %v709, %v719
        %s722 = sld [smem:[#allocation2 + $0x26]]
        %v723 = vstv %s722
        %v724 = vmul.f32 %v293, %v723
        %v725 = vmul.f32 %v294, %v723
        %v726 = vadd.f32 %v714, %v724
        %v727 = vadd.f32 %v715, %v725
        %s728 = sld [smem:[#allocation2 + $0x27]]
        %v729 = vstv %s728
        %v730 = vmul.f32 %v293, %v729
        %v731 = vmul.f32 %v294, %v729
        %v732 = vadd.f32 %v720, %v730
        %v733 = vadd.f32 %v721, %v731
        %s734 = sld [smem:[#allocation2 + $0x36]]
        %v735 = vstv %s734
        %v736 = vmul.f32 %v296, %v735
        %v737 = vmul.f32 %v297, %v735
        %v738 = vadd.f32 %v726, %v736
        %v739 = vadd.f32 %v727, %v737
        %s740 = sld [smem:[#allocation2 + $0x37]]
        %v741 = vstv %s740
        %v742 = vmul.f32 %v296, %v741
        %v743 = vmul.f32 %v297, %v741
        %v744 = vadd.f32 %v732, %v742
        %v745 = vadd.f32 %v733, %v743
        %v747 = vsel %vm342, %v744, 0
        %v750 = vsel %vm342, %v745, 0
        %752 = vmatpush.msra.mxu0 0.0
        %753 = vmatpush.msra.mxu0 0.0
        %754 = vmatpush.msra.mxu0 0.0
        %755 = vmatpush.msra.mxu0 0.0
        %756 = vmatpush.msra.mxu0 0.0
        %757 = vmatpush.msra.mxu0 0.0
        %758 = vmatpush.msra.mxu0 0.0
        %759 = vmatpush.msra.mxu0 0.0
        %760 = vmatpush.msra.mxu0 0.0
        %761 = vmatpush.msra.mxu0 0.0
        %762 = vmatpush.msra.mxu0 0.0
        %763 = vmatpush.msra.mxu0 0.0
        %764 = vmatpush.msra.mxu0 0.0
        %765 = vmatpush.msra.mxu0 0.0
        %766 = vmatpush.msra.mxu0 %v258
        %767 = vmatpush.msra.mxu0 %v257
        %768 = vmatmul.f32.gmra.mxu0 %v747
        %v769 = vpop.f32.mrf.mxu0
        %v770 = vadd.f32 0.0, %v769
        %771 = vmatmul.f32.gmra.mxu0 %v750
        %v772 = vpop.f32.mrf.mxu0
        %v773 = vadd.f32 0.0, %v772
        %774 = vdwg.mxu0
        %v776 = vsel %vm342, %v738, 0
        %v779 = vsel %vm342, %v739, 0
        %781 = vmatpush.msra.mxu0 0.0
        %782 = vmatpush.msra.mxu0 0.0
        %783 = vmatpush.msra.mxu0 0.0
        %784 = vmatpush.msra.mxu0 0.0
        %785 = vmatpush.msra.mxu0 0.0
        %786 = vmatpush.msra.mxu0 0.0
        %787 = vmatpush.msra.mxu0 0.0
        %788 = vmatpush.msra.mxu0 0.0
        %789 = vmatpush.msra.mxu0 0.0
        %790 = vmatpush.msra.mxu0 0.0
        %791 = vmatpush.msra.mxu0 0.0
        %792 = vmatpush.msra.mxu0 0.0
        %793 = vmatpush.msra.mxu0 0.0
        %794 = vmatpush.msra.mxu0 0.0
        %795 = vmatpush.msra.mxu0 %v250
        %796 = vmatpush.msra.mxu0 %v249
        %797 = vmatmul.f32.gmra.mxu0 %v776
        %v798 = vpop.f32.mrf.mxu0
        %v799 = vadd.f32 %v770, %v798
        %800 = vmatmul.f32.gmra.mxu0 %v779
        %v801 = vpop.f32.mrf.mxu0
        %v802 = vadd.f32 %v773, %v801
        %803 = vdwg.mxu0
        %804 = vmatpush.msra.mxu0 0.0
        %805 = vmatpush.msra.mxu0 0.0
        %806 = vmatpush.msra.mxu0 0.0
        %807 = vmatpush.msra.mxu0 0.0
        %808 = vmatpush.msra.mxu0 0.0
        %809 = vmatpush.msra.mxu0 0.0
        %810 = vmatpush.msra.mxu0 0.0
        %811 = vmatpush.msra.mxu0 0.0
        %812 = vmatpush.msra.mxu0 0.0
        %813 = vmatpush.msra.mxu0 0.0
        %814 = vmatpush.msra.mxu0 0.0
        %815 = vmatpush.msra.mxu0 0.0
        %816 = vmatpush.msra.mxu0 0.0
        %817 = vmatpush.msra.mxu0 0.0
        %818 = vmatpush.msra.mxu0 %v802
        %819 = vmatpush.msra.mxu0 %v799
        %820 = vmatmul.f32.gmra.mxu0 %v504
        %v821 = vpop.f32.mrf.mxu0
        %v822 = vadd.f32 0.0, %v821
        %823 = vmatmul.f32.gmra.mxu0 %v507
        %v824 = vpop.f32.mrf.mxu0
        %v825 = vadd.f32 0.0, %v824
        %826 = vmatmul.f32.gmra.mxu0 %v510
        %v827 = vpop.f32.mrf.mxu0
        %v828 = vadd.f32 0.0, %v827
        %829 = vmatmul.f32.gmra.mxu0 %v513
        %v830 = vpop.f32.mrf.mxu0
        %v831 = vadd.f32 0.0, %v830
        %832 = vdwg.mxu0
        %833 = vmatpush.msra.mxu0 0.0
        %834 = vmatpush.msra.mxu0 0.0
        %835 = vmatpush.msra.mxu0 0.0
        %836 = vmatpush.msra.mxu0 0.0
        %837 = vmatpush.msra.mxu0 0.0
        %838 = vmatpush.msra.mxu0 0.0
        %839 = vmatpush.msra.mxu0 0.0
        %840 = vmatpush.msra.mxu0 0.0
        %841 = vmatpush.msra.mxu0 0.0
        %842 = vmatpush.msra.mxu0 0.0
        %843 = vmatpush.msra.mxu0 0.0
        %844 = vmatpush.msra.mxu0 0.0
        %845 = vmatpush.msra.mxu0 0.0
        %846 = vmatpush.msra.mxu0 0.0
        %847 = vmatpush.msra.mxu0 %v700
        %848 = vmatpush.msra.mxu0 %v697
        %849 = vmatmul.f32.gmra.mxu0 %v545
        %v850 = vpop.f32.mrf.mxu0
        %v851 = vadd.f32 %v822, %v850
        %852 = vmatmul.f32.gmra.mxu0 %v548
        %v853 = vpop.f32.mrf.mxu0
        %v854 = vadd.f32 %v825, %v853
        %855 = vmatmul.f32.gmra.mxu0 %v551
        %v856 = vpop.f32.mrf.mxu0
        %v857 = vadd.f32 %v828, %v856
        %858 = vmatmul.f32.gmra.mxu0 %v554
        %v859 = vpop.f32.mrf.mxu0
        %v860 = vadd.f32 %v831, %v859
        %861 = vdwg.mxu0
        %s862 = sld [smem:[#allocation6 + $0x1]]
        %v863 = vstv %s862
        %v864 = vadd.f32 %v851, %v863
        %v865 = vadd.f32 %v854, %v863
        %v866 = vadd.f32 %v857, %v863
        %v867 = vadd.f32 %v860, %v863
        %v868 = vmax.f32 %v864, 0.0
        %v869 = vmax.f32 %v865, 0.0
        %v870 = vmax.f32 %v866, 0.0
        %v871 = vmax.f32 %v867, 0.0
        %s872 = scalar_lea.vmem %s235, 32 [#allocation9]
        %873 = vst.msk [vmem:[%s872] sm:$0xff] %vm595, %v868
        %874 = vst.msk [vmem:[%s872 + $0x8] sm:$0xff] %vm595, %v869
        %875 = vst.msk [vmem:[%s872 + $0x10] sm:$0xff] %vm595, %v870
        %876 = vst.msk [vmem:[%s872 + $0x18] sm:$0xff] %vm595, %v871
        %s877 = sld [smem:[#allocation2 + $0x8]]
        %v878 = vstv %s877
        %v879 = vmul.f32 %v287, %v878
        %v880 = vmul.f32 %v288, %v878
        %s881 = sld [smem:[#allocation2 + $0x9]]
        %v882 = vstv %s881
        %v883 = vmul.f32 %v287, %v882
        %v884 = vmul.f32 %v288, %v882
        %s885 = sld [smem:[#allocation2 + $0x18]]
        %v886 = vstv %s885
        %v887 = vmul.f32 %v290, %v886
        %v888 = vmul.f32 %v291, %v886
        %v889 = vadd.f32 %v879, %v887
        %v890 = vadd.f32 %v880, %v888
        %s891 = sld [smem:[#allocation2 + $0x19]]
        %v892 = vstv %s891
        %v893 = vmul.f32 %v290, %v892
        %v894 = vmul.f32 %v291, %v892
        %v895 = vadd.f32 %v883, %v893
        %v896 = vadd.f32 %v884, %v894
        %s897 = sld [smem:[#allocation2 + $0x28]]
        %v898 = vstv %s897
        %v899 = vmul.f32 %v293, %v898
        %v900 = vmul.f32 %v294, %v898
        %v901 = vadd.f32 %v889, %v899
        %v902 = vadd.f32 %v890, %v900
        %s903 = sld [smem:[#allocation2 + $0x29]]
        %v904 = vstv %s903
        %v905 = vmul.f32 %v293, %v904
        %v906 = vmul.f32 %v294, %v904
        %v907 = vadd.f32 %v895, %v905
        %v908 = vadd.f32 %v896, %v906
        %s909 = sld [smem:[#allocation2 + $0x38]]
        %v910 = vstv %s909
        %v911 = vmul.f32 %v296, %v910
        %v912 = vmul.f32 %v297, %v910
        %v913 = vadd.f32 %v901, %v911
        %v914 = vadd.f32 %v902, %v912
        %s915 = sld [smem:[#allocation2 + $0x39]]
        %v916 = vstv %s915
        %v917 = vmul.f32 %v296, %v916
        %v918 = vmul.f32 %v297, %v916
        %v919 = vadd.f32 %v907, %v917
        %v920 = vadd.f32 %v908, %v918
        %v922 = vsel %vm342, %v919, 0
        %v925 = vsel %vm342, %v920, 0
        %927 = vmatpush.msra.mxu0 0.0
        %928 = vmatpush.msra.mxu0 0.0
        %929 = vmatpush.msra.mxu0 0.0
        %930 = vmatpush.msra.mxu0 0.0
        %931 = vmatpush.msra.mxu0 0.0
        %932 = vmatpush.msra.mxu0 0.0
        %933 = vmatpush.msra.mxu0 0.0
        %934 = vmatpush.msra.mxu0 0.0
        %935 = vmatpush.msra.mxu0 0.0
        %936 = vmatpush.msra.mxu0 0.0
        %937 = vmatpush.msra.mxu0 0.0
        %938 = vmatpush.msra.mxu0 0.0
        %939 = vmatpush.msra.mxu0 0.0
        %940 = vmatpush.msra.mxu0 0.0
        %941 = vmatpush.msra.mxu0 %v258
        %942 = vmatpush.msra.mxu0 %v257
        %943 = vmatmul.f32.gmra.mxu0 %v922
        %v944 = vpop.f32.mrf.mxu0
        %v945 = vadd.f32 0.0, %v944
        %946 = vmatmul.f32.gmra.mxu0 %v925
        %v947 = vpop.f32.mrf.mxu0
        %v948 = vadd.f32 0.0, %v947
        %949 = vdwg.mxu0
        %v951 = vsel %vm342, %v913, 0
        %v954 = vsel %vm342, %v914, 0
        %956 = vmatpush.msra.mxu0 0.0
        %957 = vmatpush.msra.mxu0 0.0
        %958 = vmatpush.msra.mxu0 0.0
        %959 = vmatpush.msra.mxu0 0.0
        %960 = vmatpush.msra.mxu0 0.0
        %961 = vmatpush.msra.mxu0 0.0
        %962 = vmatpush.msra.mxu0 0.0
        %963 = vmatpush.msra.mxu0 0.0
        %964 = vmatpush.msra.mxu0 0.0
        %965 = vmatpush.msra.mxu0 0.0
        %966 = vmatpush.msra.mxu0 0.0
        %967 = vmatpush.msra.mxu0 0.0
        %968 = vmatpush.msra.mxu0 0.0
        %969 = vmatpush.msra.mxu0 0.0
        %970 = vmatpush.msra.mxu0 %v250
        %971 = vmatpush.msra.mxu0 %v249
        %972 = vmatmul.f32.gmra.mxu0 %v951
        %v973 = vpop.f32.mrf.mxu0
        %v974 = vadd.f32 %v945, %v973
        %975 = vmatmul.f32.gmra.mxu0 %v954
        %v976 = vpop.f32.mrf.mxu0
        %v977 = vadd.f32 %v948, %v976
        %978 = vdwg.mxu0
        %s979 = sld [smem:[#allocation2 + $0xa]]
        %v980 = vstv %s979
        %v981 = vmul.f32 %v287, %v980
        %v982 = vmul.f32 %v288, %v980
        %s983 = sld [smem:[#allocation2 + $0xb]]
        %v984 = vstv %s983
        %v985 = vmul.f32 %v287, %v984
        %v986 = vmul.f32 %v288, %v984
        %s987 = sld [smem:[#allocation2 + $0x1a]]
        %v988 = vstv %s987
        %v989 = vmul.f32 %v290, %v988
        %v990 = vmul.f32 %v291, %v988
        %v991 = vadd.f32 %v981, %v989
        %v992 = vadd.f32 %v982, %v990
        %s993 = sld [smem:[#allocation2 + $0x1b]]
        %v994 = vstv %s993
        %v995 = vmul.f32 %v290, %v994
        %v996 = vmul.f32 %v291, %v994
        %v997 = vadd.f32 %v985, %v995
        %v998 = vadd.f32 %v986, %v996
        %s999 = sld [smem:[#allocation2 + $0x2a]]
        %v1000 = vstv %s999
        %v1001 = vmul.f32 %v293, %v1000
        %v1002 = vmul.f32 %v294, %v1000
        %v1003 = vadd.f32 %v991, %v1001
        %v1004 = vadd.f32 %v992, %v1002
        %s1005 = sld [smem:[#allocation2 + $0x2b]]
        %v1006 = vstv %s1005
        %v1007 = vmul.f32 %v293, %v1006
        %v1008 = vmul.f32 %v294, %v1006
        %v1009 = vadd.f32 %v997, %v1007
        %v1010 = vadd.f32 %v998, %v1008
        %s1011 = sld [smem:[#allocation2 + $0x3a]]
        %v1012 = vstv %s1011
        %v1013 = vmul.f32 %v296, %v1012
        %v1014 = vmul.f32 %v297, %v1012
        %v1015 = vadd.f32 %v1003, %v1013
        %v1016 = vadd.f32 %v1004, %v1014
        %s1017 = sld [smem:[#allocation2 + $0x3b]]
        %v1018 = vstv %s1017
        %v1019 = vmul.f32 %v296, %v1018
        %v1020 = vmul.f32 %v297, %v1018
        %v1021 = vadd.f32 %v1009, %v1019
        %v1022 = vadd.f32 %v1010, %v1020
        %v1024 = vsel %vm342, %v1021, 0
        %v1027 = vsel %vm342, %v1022, 0
        %1029 = vmatpush.msra.mxu0 0.0
        %1030 = vmatpush.msra.mxu0 0.0
        %1031 = vmatpush.msra.mxu0 0.0
        %1032 = vmatpush.msra.mxu0 0.0
        %1033 = vmatpush.msra.mxu0 0.0
        %1034 = vmatpush.msra.mxu0 0.0
        %1035 = vmatpush.msra.mxu0 0.0
        %1036 = vmatpush.msra.mxu0 0.0
        %1037 = vmatpush.msra.mxu0 0.0
        %1038 = vmatpush.msra.mxu0 0.0
        %1039 = vmatpush.msra.mxu0 0.0
        %1040 = vmatpush.msra.mxu0 0.0
        %1041 = vmatpush.msra.mxu0 0.0
        %1042 = vmatpush.msra.mxu0 0.0
        %1043 = vmatpush.msra.mxu0 %v258
        %1044 = vmatpush.msra.mxu0 %v257
        %1045 = vmatmul.f32.gmra.mxu0 %v1024
        %v1046 = vpop.f32.mrf.mxu0
        %v1047 = vadd.f32 0.0, %v1046
        %1048 = vmatmul.f32.gmra.mxu0 %v1027
        %v1049 = vpop.f32.mrf.mxu0
        %v1050 = vadd.f32 0.0, %v1049
        %1051 = vdwg.mxu0
        %v1053 = vsel %vm342, %v1015, 0
        %v1056 = vsel %vm342, %v1016, 0
        %1058 = vmatpush.msra.mxu0 0.0
        %1059 = vmatpush.msra.mxu0 0.0
        %1060 = vmatpush.msra.mxu0 0.0
        %1061 = vmatpush.msra.mxu0 0.0
        %1062 = vmatpush.msra.mxu0 0.0
        %1063 = vmatpush.msra.mxu0 0.0
        %1064 = vmatpush.msra.mxu0 0.0
        %1065 = vmatpush.msra.mxu0 0.0
        %1066 = vmatpush.msra.mxu0 0.0
        %1067 = vmatpush.msra.mxu0 0.0
        %1068 = vmatpush.msra.mxu0 0.0
        %1069 = vmatpush.msra.mxu0 0.0
        %1070 = vmatpush.msra.mxu0 0.0
        %1071 = vmatpush.msra.mxu0 0.0
        %1072 = vmatpush.msra.mxu0 %v250
        %1073 = vmatpush.msra.mxu0 %v249
        %1074 = vmatmul.f32.gmra.mxu0 %v1053
        %v1075 = vpop.f32.mrf.mxu0
        %v1076 = vadd.f32 %v1047, %v1075
        %1077 = vmatmul.f32.gmra.mxu0 %v1056
        %v1078 = vpop.f32.mrf.mxu0
        %v1079 = vadd.f32 %v1050, %v1078
        %1080 = vdwg.mxu0
        %1081 = vmatpush.msra.mxu0 0.0
        %1082 = vmatpush.msra.mxu0 0.0
        %1083 = vmatpush.msra.mxu0 0.0
        %1084 = vmatpush.msra.mxu0 0.0
        %1085 = vmatpush.msra.mxu0 0.0
        %1086 = vmatpush.msra.mxu0 0.0
        %1087 = vmatpush.msra.mxu0 0.0
        %1088 = vmatpush.msra.mxu0 0.0
        %1089 = vmatpush.msra.mxu0 0.0
        %1090 = vmatpush.msra.mxu0 0.0
        %1091 = vmatpush.msra.mxu0 0.0
        %1092 = vmatpush.msra.mxu0 0.0
        %1093 = vmatpush.msra.mxu0 0.0
        %1094 = vmatpush.msra.mxu0 0.0
        %1095 = vmatpush.msra.mxu0 %v1079
        %1096 = vmatpush.msra.mxu0 %v1076
        %1097 = vmatmul.f32.gmra.mxu0 %v504
        %v1098 = vpop.f32.mrf.mxu0
        %v1099 = vadd.f32 0.0, %v1098
        %1100 = vmatmul.f32.gmra.mxu0 %v507
        %v1101 = vpop.f32.mrf.mxu0
        %v1102 = vadd.f32 0.0, %v1101
        %1103 = vmatmul.f32.gmra.mxu0 %v510
        %v1104 = vpop.f32.mrf.mxu0
        %v1105 = vadd.f32 0.0, %v1104
        %1106 = vmatmul.f32.gmra.mxu0 %v513
        %v1107 = vpop.f32.mrf.mxu0
        %v1108 = vadd.f32 0.0, %v1107
        %1109 = vdwg.mxu0
        %1110 = vmatpush.msra.mxu0 0.0
        %1111 = vmatpush.msra.mxu0 0.0
        %1112 = vmatpush.msra.mxu0 0.0
        %1113 = vmatpush.msra.mxu0 0.0
        %1114 = vmatpush.msra.mxu0 0.0
        %1115 = vmatpush.msra.mxu0 0.0
        %1116 = vmatpush.msra.mxu0 0.0
        %1117 = vmatpush.msra.mxu0 0.0
        %1118 = vmatpush.msra.mxu0 0.0
        %1119 = vmatpush.msra.mxu0 0.0
        %1120 = vmatpush.msra.mxu0 0.0
        %1121 = vmatpush.msra.mxu0 0.0
        %1122 = vmatpush.msra.mxu0 0.0
        %1123 = vmatpush.msra.mxu0 0.0
        %1124 = vmatpush.msra.mxu0 %v977
        %1125 = vmatpush.msra.mxu0 %v974
        %1126 = vmatmul.f32.gmra.mxu0 %v545
        %v1127 = vpop.f32.mrf.mxu0
        %v1128 = vadd.f32 %v1099, %v1127
        %1129 = vmatmul.f32.gmra.mxu0 %v548
        %v1130 = vpop.f32.mrf.mxu0
        %v1131 = vadd.f32 %v1102, %v1130
        %1132 = vmatmul.f32.gmra.mxu0 %v551
        %v1133 = vpop.f32.mrf.mxu0
        %v1134 = vadd.f32 %v1105, %v1133
        %1135 = vmatmul.f32.gmra.mxu0 %v554
        %v1136 = vpop.f32.mrf.mxu0
        %v1137 = vadd.f32 %v1108, %v1136
        %1138 = vdwg.mxu0
        %s1139 = sld [smem:[#allocation6 + $0x2]]
        %v1140 = vstv %s1139
        %v1141 = vadd.f32 %v1128, %v1140
        %v1142 = vadd.f32 %v1131, %v1140
        %v1143 = vadd.f32 %v1134, %v1140
        %v1144 = vadd.f32 %v1137, %v1140
        %v1145 = vmax.f32 %v1141, 0.0
        %v1146 = vmax.f32 %v1142, 0.0
        %v1147 = vmax.f32 %v1143, 0.0
        %v1148 = vmax.f32 %v1144, 0.0
        %s1149 = scalar_lea.vmem %s235, 64 [#allocation9]
        %1150 = vst.msk [vmem:[%s1149] sm:$0xff] %vm595, %v1145
        %1151 = vst.msk [vmem:[%s1149 + $0x8] sm:$0xff] %vm595, %v1146
        %1152 = vst.msk [vmem:[%s1149 + $0x10] sm:$0xff] %vm595, %v1147
        %1153 = vst.msk [vmem:[%s1149 + $0x18] sm:$0xff] %vm595, %v1148
        %s1154 = sld [smem:[#allocation2 + $0xc]]
        %v1155 = vstv %s1154
        %v1156 = vmul.f32 %v287, %v1155
        %v1157 = vmul.f32 %v288, %v1155
        %s1158 = sld [smem:[#allocation2 + $0xd]]
        %v1159 = vstv %s1158
        %v1160 = vmul.f32 %v287, %v1159
        %v1161 = vmul.f32 %v288, %v1159
        %s1162 = sld [smem:[#allocation2 + $0x1c]]
        %v1163 = vstv %s1162
        %v1164 = vmul.f32 %v290, %v1163
        %v1165 = vmul.f32 %v291, %v1163
        %v1166 = vadd.f32 %v1156, %v1164
        %v1167 = vadd.f32 %v1157, %v1165
        %s1168 = sld [smem:[#allocation2 + $0x1d]]
        %v1169 = vstv %s1168
        %v1170 = vmul.f32 %v290, %v1169
        %v1171 = vmul.f32 %v291, %v1169
        %v1172 = vadd.f32 %v1160, %v1170
        %v1173 = vadd.f32 %v1161, %v1171
        %s1174 = sld [smem:[#allocation2 + $0x2c]]
        %v1175 = vstv %s1174
        %v1176 = vmul.f32 %v293, %v1175
        %v1177 = vmul.f32 %v294, %v1175
        %v1178 = vadd.f32 %v1166, %v1176
        %v1179 = vadd.f32 %v1167, %v1177
        %s1180 = sld [smem:[#allocation2 + $0x2d]]
        %v1181 = vstv %s1180
        %v1182 = vmul.f32 %v293, %v1181
        %v1183 = vmul.f32 %v294, %v1181
        %v1184 = vadd.f32 %v1172, %v1182
        %v1185 = vadd.f32 %v1173, %v1183
        %s1186 = sld [smem:[#allocation2 + $0x3c]]
        %v1187 = vstv %s1186
        %v1188 = vmul.f32 %v296, %v1187
        %v1189 = vmul.f32 %v297, %v1187
        %v1190 = vadd.f32 %v1178, %v1188
        %v1191 = vadd.f32 %v1179, %v1189
        %s1192 = sld [smem:[#allocation2 + $0x3d]]
        %v1193 = vstv %s1192
        %v1194 = vmul.f32 %v296, %v1193
        %v1195 = vmul.f32 %v297, %v1193
        %v1196 = vadd.f32 %v1184, %v1194
        %v1197 = vadd.f32 %v1185, %v1195
        %v1199 = vsel %vm342, %v1196, 0
        %v1202 = vsel %vm342, %v1197, 0
        %1204 = vmatpush.msra.mxu0 0.0
        %1205 = vmatpush.msra.mxu0 0.0
        %1206 = vmatpush.msra.mxu0 0.0
        %1207 = vmatpush.msra.mxu0 0.0
        %1208 = vmatpush.msra.mxu0 0.0
        %1209 = vmatpush.msra.mxu0 0.0
        %1210 = vmatpush.msra.mxu0 0.0
        %1211 = vmatpush.msra.mxu0 0.0
        %1212 = vmatpush.msra.mxu0 0.0
        %1213 = vmatpush.msra.mxu0 0.0
        %1214 = vmatpush.msra.mxu0 0.0
        %1215 = vmatpush.msra.mxu0 0.0
        %1216 = vmatpush.msra.mxu0 0.0
        %1217 = vmatpush.msra.mxu0 0.0
        %1218 = vmatpush.msra.mxu0 %v258
        %1219 = vmatpush.msra.mxu0 %v257
        %1220 = vmatmul.f32.gmra.mxu0 %v1199
        %v1221 = vpop.f32.mrf.mxu0
        %v1222 = vadd.f32 0.0, %v1221
        %1223 = vmatmul.f32.gmra.mxu0 %v1202
        %v1224 = vpop.f32.mrf.mxu0
        %v1225 = vadd.f32 0.0, %v1224
        %1226 = vdwg.mxu0
        %v1228 = vsel %vm342, %v1190, 0
        %v1231 = vsel %vm342, %v1191, 0
        %1233 = vmatpush.msra.mxu0 0.0
        %1234 = vmatpush.msra.mxu0 0.0
        %1235 = vmatpush.msra.mxu0 0.0
        %1236 = vmatpush.msra.mxu0 0.0
        %1237 = vmatpush.msra.mxu0 0.0
        %1238 = vmatpush.msra.mxu0 0.0
        %1239 = vmatpush.msra.mxu0 0.0
        %1240 = vmatpush.msra.mxu0 0.0
        %1241 = vmatpush.msra.mxu0 0.0
        %1242 = vmatpush.msra.mxu0 0.0
        %1243 = vmatpush.msra.mxu0 0.0
        %1244 = vmatpush.msra.mxu0 0.0
        %1245 = vmatpush.msra.mxu0 0.0
        %1246 = vmatpush.msra.mxu0 0.0
        %1247 = vmatpush.msra.mxu0 %v250
        %1248 = vmatpush.msra.mxu0 %v249
        %1249 = vmatmul.f32.gmra.mxu0 %v1228
        %v1250 = vpop.f32.mrf.mxu0
        %v1251 = vadd.f32 %v1222, %v1250
        %1252 = vmatmul.f32.gmra.mxu0 %v1231
        %v1253 = vpop.f32.mrf.mxu0
        %v1254 = vadd.f32 %v1225, %v1253
        %1255 = vdwg.mxu0
        %s1256 = sld [smem:[#allocation2 + $0xe]]
        %v1257 = vstv %s1256
        %v1258 = vmul.f32 %v287, %v1257
        %v1259 = vmul.f32 %v288, %v1257
        %s1260 = sld [smem:[#allocation2 + $0xf]]
        %v1261 = vstv %s1260
        %v1262 = vmul.f32 %v287, %v1261
        %v1263 = vmul.f32 %v288, %v1261
        %s1264 = sld [smem:[#allocation2 + $0x1e]]
        %v1265 = vstv %s1264
        %v1266 = vmul.f32 %v290, %v1265
        %v1267 = vmul.f32 %v291, %v1265
        %v1268 = vadd.f32 %v1258, %v1266
        %v1269 = vadd.f32 %v1259, %v1267
        %s1270 = sld [smem:[#allocation2 + $0x1f]]
        %v1271 = vstv %s1270
        %v1272 = vmul.f32 %v290, %v1271
        %v1273 = vmul.f32 %v291, %v1271
        %v1274 = vadd.f32 %v1262, %v1272
        %v1275 = vadd.f32 %v1263, %v1273
        %s1276 = sld [smem:[#allocation2 + $0x2e]]
        %v1277 = vstv %s1276
        %v1278 = vmul.f32 %v293, %v1277
        %v1279 = vmul.f32 %v294, %v1277
        %v1280 = vadd.f32 %v1268, %v1278
        %v1281 = vadd.f32 %v1269, %v1279
        %s1282 = sld [smem:[#allocation2 + $0x2f]]
        %v1283 = vstv %s1282
        %v1284 = vmul.f32 %v293, %v1283
        %v1285 = vmul.f32 %v294, %v1283
        %v1286 = vadd.f32 %v1274, %v1284
        %v1287 = vadd.f32 %v1275, %v1285
        %s1288 = sld [smem:[#allocation2 + $0x3e]]
        %v1289 = vstv %s1288
        %v1290 = vmul.f32 %v296, %v1289
        %v1291 = vmul.f32 %v297, %v1289
        %v1292 = vadd.f32 %v1280, %v1290
        %v1293 = vadd.f32 %v1281, %v1291
        %s1294 = sld [smem:[#allocation2 + $0x3f]]
        %v1295 = vstv %s1294
        %v1296 = vmul.f32 %v296, %v1295
        %v1297 = vmul.f32 %v297, %v1295
        %v1298 = vadd.f32 %v1286, %v1296
        %v1299 = vadd.f32 %v1287, %v1297
        %v1301 = vsel %vm342, %v1298, 0
        %v1304 = vsel %vm342, %v1299, 0
        %1306 = vmatpush.msra.mxu0 0.0
        %1307 = vmatpush.msra.mxu0 0.0
        %1308 = vmatpush.msra.mxu0 0.0
        %1309 = vmatpush.msra.mxu0 0.0
        %1310 = vmatpush.msra.mxu0 0.0
        %1311 = vmatpush.msra.mxu0 0.0
        %1312 = vmatpush.msra.mxu0 0.0
        %1313 = vmatpush.msra.mxu0 0.0
        %1314 = vmatpush.msra.mxu0 0.0
        %1315 = vmatpush.msra.mxu0 0.0
        %1316 = vmatpush.msra.mxu0 0.0
        %1317 = vmatpush.msra.mxu0 0.0
        %1318 = vmatpush.msra.mxu0 0.0
        %1319 = vmatpush.msra.mxu0 0.0
        %1320 = vmatpush.msra.mxu0 %v258
        %1321 = vmatpush.msra.mxu0 %v257
        %1322 = vmatmul.f32.gmra.mxu0 %v1301
        %v1323 = vpop.f32.mrf.mxu0
        %v1324 = vadd.f32 0.0, %v1323
        %1325 = vmatmul.f32.gmra.mxu0 %v1304
        %v1326 = vpop.f32.mrf.mxu0
        %v1327 = vadd.f32 0.0, %v1326
        %1328 = vdwg.mxu0
        %v1330 = vsel %vm342, %v1292, 0
        %v1333 = vsel %vm342, %v1293, 0
        %1335 = vmatpush.msra.mxu0 0.0
        %1336 = vmatpush.msra.mxu0 0.0
        %1337 = vmatpush.msra.mxu0 0.0
        %1338 = vmatpush.msra.mxu0 0.0
        %1339 = vmatpush.msra.mxu0 0.0
        %1340 = vmatpush.msra.mxu0 0.0
        %1341 = vmatpush.msra.mxu0 0.0
        %1342 = vmatpush.msra.mxu0 0.0
        %1343 = vmatpush.msra.mxu0 0.0
        %1344 = vmatpush.msra.mxu0 0.0
        %1345 = vmatpush.msra.mxu0 0.0
        %1346 = vmatpush.msra.mxu0 0.0
        %1347 = vmatpush.msra.mxu0 0.0
        %1348 = vmatpush.msra.mxu0 0.0
        %1349 = vmatpush.msra.mxu0 %v250
        %1350 = vmatpush.msra.mxu0 %v249
        %1351 = vmatmul.f32.gmra.mxu0 %v1330
        %v1352 = vpop.f32.mrf.mxu0
        %v1353 = vadd.f32 %v1324, %v1352
        %1354 = vmatmul.f32.gmra.mxu0 %v1333
        %v1355 = vpop.f32.mrf.mxu0
        %v1356 = vadd.f32 %v1327, %v1355
        %1357 = vdwg.mxu0
        %1358 = vmatpush.msra.mxu0 0.0
        %1359 = vmatpush.msra.mxu0 0.0
        %1360 = vmatpush.msra.mxu0 0.0
        %1361 = vmatpush.msra.mxu0 0.0
        %1362 = vmatpush.msra.mxu0 0.0
        %1363 = vmatpush.msra.mxu0 0.0
        %1364 = vmatpush.msra.mxu0 0.0
        %1365 = vmatpush.msra.mxu0 0.0
        %1366 = vmatpush.msra.mxu0 0.0
        %1367 = vmatpush.msra.mxu0 0.0
        %1368 = vmatpush.msra.mxu0 0.0
        %1369 = vmatpush.msra.mxu0 0.0
        %1370 = vmatpush.msra.mxu0 0.0
        %1371 = vmatpush.msra.mxu0 0.0
        %1372 = vmatpush.msra.mxu0 %v1356
        %1373 = vmatpush.msra.mxu0 %v1353
        %1374 = vmatmul.f32.gmra.mxu0 %v504
        %v1375 = vpop.f32.mrf.mxu0
        %v1376 = vadd.f32 0.0, %v1375
        %1377 = vmatmul.f32.gmra.mxu0 %v507
        %v1378 = vpop.f32.mrf.mxu0
        %v1379 = vadd.f32 0.0, %v1378
        %1380 = vmatmul.f32.gmra.mxu0 %v510
        %v1381 = vpop.f32.mrf.mxu0
        %v1382 = vadd.f32 0.0, %v1381
        %1383 = vmatmul.f32.gmra.mxu0 %v513
        %v1384 = vpop.f32.mrf.mxu0
        %v1385 = vadd.f32 0.0, %v1384
        %1386 = vdwg.mxu0
        %1387 = vmatpush.msra.mxu0 0.0
        %1388 = vmatpush.msra.mxu0 0.0
        %1389 = vmatpush.msra.mxu0 0.0
        %1390 = vmatpush.msra.mxu0 0.0
        %1391 = vmatpush.msra.mxu0 0.0
        %1392 = vmatpush.msra.mxu0 0.0
        %1393 = vmatpush.msra.mxu0 0.0
        %1394 = vmatpush.msra.mxu0 0.0
        %1395 = vmatpush.msra.mxu0 0.0
        %1396 = vmatpush.msra.mxu0 0.0
        %1397 = vmatpush.msra.mxu0 0.0
        %1398 = vmatpush.msra.mxu0 0.0
        %1399 = vmatpush.msra.mxu0 0.0
        %1400 = vmatpush.msra.mxu0 0.0
        %1401 = vmatpush.msra.mxu0 %v1254
        %1402 = vmatpush.msra.mxu0 %v1251
        %1403 = vmatmul.f32.gmra.mxu0 %v545
        %v1404 = vpop.f32.mrf.mxu0
        %v1405 = vadd.f32 %v1376, %v1404
        %1406 = vmatmul.f32.gmra.mxu0 %v548
        %v1407 = vpop.f32.mrf.mxu0
        %v1408 = vadd.f32 %v1379, %v1407
        %1409 = vmatmul.f32.gmra.mxu0 %v551
        %v1410 = vpop.f32.mrf.mxu0
        %v1411 = vadd.f32 %v1382, %v1410
        %1412 = vmatmul.f32.gmra.mxu0 %v554
        %v1413 = vpop.f32.mrf.mxu0
        %v1414 = vadd.f32 %v1385, %v1413
        %1415 = vdwg.mxu0
        %s1416 = sld [smem:[#allocation6 + $0x3]]
        %v1417 = vstv %s1416
        %v1418 = vadd.f32 %v1405, %v1417
        %v1419 = vadd.f32 %v1408, %v1417
        %v1420 = vadd.f32 %v1411, %v1417
        %v1421 = vadd.f32 %v1414, %v1417
        %v1422 = vmax.f32 %v1418, 0.0
        %v1423 = vmax.f32 %v1419, 0.0
        %v1424 = vmax.f32 %v1420, 0.0
        %v1425 = vmax.f32 %v1421, 0.0
        %s1426 = scalar_lea.vmem %s235, 96 [#allocation9]
        %1427 = vst.msk [vmem:[%s1426] sm:$0xff] %vm595, %v1422
        %1428 = vst.msk [vmem:[%s1426 + $0x8] sm:$0xff] %vm595, %v1423
        %1429 = vst.msk [vmem:[%s1426 + $0x10] sm:$0xff] %vm595, %v1424
        %1430 = vst.msk [vmem:[%s1426 + $0x18] sm:$0xff] %vm595, %v1425
        %s1431 = sand.u32 %s114, 1
        %s1432 = scalar_lea.sflag [#allocation4], %s1431
        %s1433 = sand.u32 %s114, 1
        %s1434 = smul.addr %s1433, 128
        %s1435 = scalar_lea.vmem [#allocation9], %s1434
        // Predicated region
        $region45: #{up_forward.1} parent=31 // pred_check
          %p1436 = pneg %p124
        $region46: #{up_forward.1} parent=31 // pred_check_branch
          %1438 = sbr.rel (%p1436) target = $region48
        $region47: #{up_forward.1} parent=31 // pred_region
          %s1439 = smul.u32 4, %s27
          %1441 = vsyncadd %s1432, 0
          %s1442 = smul.addr %s26, 16
          %s1443 = sadd.s32 %s1439, %s1442
          %s1444 = smul.addr %s1443, 8
          %s1445 = scalar_lea.hbm %s3, %s1444
          %s1446 = sshll.u32 %s1435, 4
          %s1447 = int_to_ptr.vmem [resolvable:$true] %s1446
          %s1448 = sshll.u32 %s1445, 4
          %s1449 = int_to_ptr.hbm [resolvable:$true] %s1448
          %1454 = dma.vmem_to_hbm [thread:$0]  %s1447, 2048, %s1449, %s1432, 128, 128, 8
        $region48: #{up_forward.1} parent=31 // pred_fallthru
          _
      $region32: #{up_forward.1} parent=5 // pred_fallthru
        _
      %p1455 = scmp.le.s32.totalorder 2, %s17
      // Predicated region
      $region49: #{up_forward.1} parent=5 // pred_check
        %p1456 = pneg %p1455
      $region50: #{up_forward.1} parent=5 // pred_check_branch
        %1458 = sbr.rel (%p1456) target = $region52
      $region51: #{up_forward.1} parent=5 // pred_region
        %s1459 = ssub.s32 %s17, 2
        // Predicated region
        $region53: #{up_forward.1} parent=51 // pred_check
          %p1460 = pneg %p130
        $region54: #{up_forward.1} parent=51 // pred_check_branch
          %1462 = sbr.rel (%p1460) target = $region56
        $region55: #{up_forward.1} parent=51 // pred_region
          %s1463 = sand.u32 %s115, 1
          %s1464 = scalar_lea.sflag [#allocation4], %s1463
          %s1465 = sand.u32 %s115, 1
          %s1466 = smul.addr %s1465, 128
          %s1467 = scalar_lea.vmem [#allocation9], %s1466
          %1469 = dma.done %s1464, 2048
        $region56: #{up_forward.1} parent=51 // pred_fallthru
          _
      $region52: #{up_forward.1} parent=5 // pred_fallthru
        _
    $region6: #{up_forward.1} parent=1 // loop_footer
      %s21 = sadd.s32 1, %s17
    $region7: #{up_forward.1} parent=1 // loop_footer_branch
      %16 = sbr.rel target = $region3
    $region8: #{up_forward.1} parent=1 // loop_exit
      _
    %1470 = vsyncpa [#allocation3], 1
    %s1471 = scalar_lea.sflag [#allocation3], 1
    %1472 = vsyncpa %s1471, 1
    %1473 = vsyncpa [#allocation4], 1
    %s1474 = scalar_lea.sflag [#allocation4], 1
    %1475 = vsyncpa %s1474, 1
    %1476 = vsyncpa [#allocation5], 1
    %s1477 = scalar_lea.sflag [#allocation5], 1
    %1478 = vsyncpa %s1477, 1
    %1479 = vsyncpa [#allocation7], 1

</llo_original>
